<compile_context>
chip_gen: v7x
topology: tpu7x:2x2x1
jax: 0.10.0
libtpu: 0.0.40
codegen_flags: <defaults>
</compile_context>

<pallas_src>
import math
from functools import partial

import jax
import jax.numpy as jnp
from jax.experimental import pallas as pl
from jax.experimental.pallas import tpu as pltpu


# ---------------------------------------------------------------------------
# Fused Pallas kernel (one grid step == one batch element)
# ---------------------------------------------------------------------------

def _mha_kernel(q_ref, k_ref, v_ref, w_in_ref, b_in_ref, w_out_ref, b_out_ref,
                o_ref, *, num_heads, scale):
    """Fused multi-head attention forward for one batch element.

    q_ref:     (L, E)    queries of this batch (batch-major rows)
    k_ref:     (S, E)    keys of this batch
    v_ref:     (S, E)    values of this batch
    w_in_ref:  (3E, E)   packed [Wq; Wk; Wv] in PyTorch (out, in) layout
    b_in_ref:  (3, E)    packed in_proj bias: rows = [bq, bk, bv]
    w_out_ref: (E, E)    out-projection weight, PyTorch (out, in) layout
    b_out_ref: (1, E)    out-projection bias
    o_ref:     (L, E)    output rows for this batch
    """
    E = q_ref.shape[-1]
    D = E // num_heads

    # x @ W.T  (PyTorch Linear): contract last dim of x with dim 1 of W.
    dn_xwt = (((1,), (1,)), ((), ()))

    q = q_ref[...].astype(jnp.float32)          # (L, E)
    k = k_ref[...].astype(jnp.float32)          # (S, E)
    v = v_ref[...].astype(jnp.float32)          # (S, E)

    # --- Fused in-projections: ONE full-width matmul per tensor (K=E, N=E). ---
    # (q, k, v are distinct tensors, so a single (rows, E) x (E, 3E) matmul is
    #  not applicable; three (E x E) matmuls is the fused form here.)
    q2 = jax.lax.dot_general(q, w_in_ref[0:E, :], dn_xwt,
                             preferred_element_type=jnp.float32)
    q2 = (q2 + b_in_ref[0:1, :].astype(jnp.float32)) * scale   # fold 1/sqrt(D)
    k2 = jax.lax.dot_general(k, w_in_ref[E:2 * E, :], dn_xwt,
                             preferred_element_type=jnp.float32)
    k2 = k2 + b_in_ref[1:2, :].astype(jnp.float32)
    v2 = jax.lax.dot_general(v, w_in_ref[2 * E:3 * E, :], dn_xwt,
                             preferred_element_type=jnp.float32)
    v2 = v2 + b_in_ref[2:3, :].astype(jnp.float32)

    # --- Per-head scaled-dot-product attention (heads are block-diagonal, so
    #     the per-head matmuls are inherently small; operands are cheap static
    #     lane slices of the already-projected q2/k2/v2, not extra matmuls). ---
    head_outs = []
    for h in range(num_heads):
        lo, hi = h * D, (h + 1) * D
        qh = q2[:, lo:hi]                        # (L, D)
        kh = k2[:, lo:hi]                        # (S, D)
        vh = v2[:, lo:hi]                        # (S, D)

        s = jax.lax.dot_general(qh, kh, dn_xwt,  # qh @ kh.T -> (L, S)
                                preferred_element_type=jnp.float32)

        # Numerically-stable softmax over the source axis (exact divide on the
        # tiny (L, 1) denominator — negligible cost, exact parity).
        m = jnp.max(s, axis=-1, keepdims=True)
        p = jnp.exp(s - m)
        denom = jnp.sum(p, axis=-1, keepdims=True)
        p = p * (1.0 / denom)

        head_outs.append(jnp.dot(p, vh, preferred_element_type=jnp.float32))

    o_heads = jnp.concatenate(head_outs, axis=-1)               # (L, E)

    # --- Single fused out-projection (K=E, N=E) + bias. ---
    out = jax.lax.dot_general(o_heads, w_out_ref[...], dn_xwt,
                              preferred_element_type=jnp.float32)
    out = out + b_out_ref[...].astype(jnp.float32)
    o_ref[...] = out.astype(o_ref.dtype)


# ---------------------------------------------------------------------------
# Forward wrapper (single pallas_call; only cheap layout glue outside)
# ---------------------------------------------------------------------------

def multi_attention_forward(query, key, value, params, num_heads):
    """Equivalent of MultiAttention.forward (nn.MultiheadAttention, eval mode).

    query: (L, N, E); key/value: (S, N, E)  [batch_first=False layout].
    """
    L, N, E = query.shape
    S = key.shape[0]
    D = E // num_heads
    assert D * num_heads == E
    scale = 1.0 / math.sqrt(D)

    # (seq, batch, E) -> batch-major rows.  Kept in the wrapper so every op
    # inside the kernel is a plain 2-D matmul / slice (safe Mosaic lowering).
    q2d = jnp.transpose(query, (1, 0, 2)).reshape(N * L, E)
    k2d = jnp.transpose(key, (1, 0, 2)).reshape(N * S, E)
    v2d = jnp.transpose(value, (1, 0, 2)).reshape(N * S, E)

    w_in = params["in_proj_weight"]                      # (3E, E) -- no .T
    b_in = params["in_proj_bias"].reshape(3, E)          # rows = [bq, bk, bv]
    w_out = params["out_proj_weight"]                    # (E, E)  -- no .T
    b_out = params["out_proj_bias"].reshape(1, E)        # (1, E)

    # Grid over the batch dimension, marked "parallel": disjoint output rows
    # per step; on v7x the two TensorCores split the batches.  Weight blocks
    # have a constant index map so they stay VMEM-resident across steps.
    out2d = pl.pallas_call(
        partial(_mha_kernel, num_heads=num_heads, scale=scale),
        grid=(N,),
        out_shape=jax.ShapeDtypeStruct((N * L, E), query.dtype),
        in_specs=[
            pl.BlockSpec((L, E), lambda n: (n, 0)),
            pl.BlockSpec((S, E), lambda n: (n, 0)),
            pl.BlockSpec((S, E), lambda n: (n, 0)),
            pl.BlockSpec((3 * E, E), lambda n: (0, 0)),
            pl.BlockSpec((3, E), lambda n: (0, 0)),
            pl.BlockSpec((E, E), lambda n: (0, 0)),
            pl.BlockSpec((1, E), lambda n: (0, 0)),
        ],
        out_specs=pl.BlockSpec((L, E), lambda n: (n, 0)),
        compiler_params=pltpu.CompilerParams(
            dimension_semantics=("parallel",)),
    )(q2d, k2d, v2d, w_in, b_in, w_out, b_out)

    return out2d.reshape(N, L, E).transpose(1, 0, 2)     # -> (L, N, E)


# ---------------------------------------------------------------------------
# Pure-JAX reference (correctness self-check)
# ---------------------------------------------------------------------------

def multi_attention_reference(query, key, value, params, num_heads):
    L, N, E = query.shape
    S = key.shape[0]
    head_dim = E // num_heads
    w_in, b_in = params["in_proj_weight"], params["in_proj_bias"]
    w_out, b_out = params["out_proj_weight"], params["out_proj_bias"]

    q2 = query @ w_in[:E].T + b_in[:E]
    k2 = key @ w_in[E:2 * E].T + b_in[E:2 * E]
    v2 = value @ w_in[2 * E:].T + b_in[2 * E:]

    q3 = q2.reshape(L, N * num_heads, head_dim).transpose(1, 0, 2)
    k3 = k2.reshape(S, N * num_heads, head_dim).transpose(1, 0, 2)
    v3 = v2.reshape(S, N * num_heads, head_dim).transpose(1, 0, 2)

    s = jnp.einsum("bld,bsd->bls", q3, k3) / math.sqrt(head_dim)
    p = jax.nn.softmax(s, axis=-1)
    o = jnp.einsum("bls,bsd->bld", p, v3)
    o = o.transpose(1, 0, 2).reshape(L, N, E)
    return o @ w_out.T + b_out


# ---------------------------------------------------------------------------
# Main
# ---------------------------------------------------------------------------

if __name__ == "__main__":
    # Module-consistent small shapes: hidden_size=32, num_heads=4,
    # target seq L=8, source seq S=8, batch N=2.
    hidden_size = 32
    num_heads = 4
    L, S, N = 8, 8, 2

    key0 = jax.random.PRNGKey(0)
    k_q, k_k, k_v, k_win, k_bin, k_wout, k_bout = jax.random.split(key0, 7)

    query = jax.random.normal(k_q, (L, N, hidden_size), dtype=jnp.float32)
    key_in = jax.random.normal(k_k, (S, N, hidden_size), dtype=jnp.float32)
    value = jax.random.normal(k_v, (S, N, hidden_size), dtype=jnp.float32)

    # Deterministic synthetic parameters (shapes match nn.MultiheadAttention).
    params = {
        "in_proj_weight": jax.random.normal(
            k_win, (3 * hidden_size, hidden_size), dtype=jnp.float32
        ) * (1.0 / math.sqrt(hidden_size)),
        "in_proj_bias": jax.random.normal(k_bin, (3 * hidden_size,), dtype=jnp.float32) * 0.01,
        "out_proj_weight": jax.random.normal(
            k_wout, (hidden_size, hidden_size), dtype=jnp.float32
        ) * (1.0 / math.sqrt(hidden_size)),
        "out_proj_bias": jax.random.normal(k_bout, (hidden_size,), dtype=jnp.float32) * 0.01,
    }

    out = multi_attention_forward(query, key_in, value, params, num_heads)
    out = jax.block_until_ready(out)

    ref = multi_attention_reference(query, key_in, value, params, num_heads)
    assert out.shape == (L, N, hidden_size)
    assert jnp.allclose(out, ref, atol=2e-4, rtol=2e-4), "Pallas output mismatch vs reference"

    print("KERNEL_OK")
</pallas_src>

<mosaic_0001>
module attributes {stable_mosaic.version = 11 : i64} {
  func.func @_mha_kernel(%arg0: i32, %arg1: memref<8x32xf32, #tpu.memory_space<vmem>>, %arg2: memref<8x32xf32, #tpu.memory_space<vmem>>, %arg3: memref<8x32xf32, #tpu.memory_space<vmem>>, %arg4: memref<96x32xf32, #tpu.memory_space<vmem>>, %arg5: memref<3x32xf32, #tpu.memory_space<vmem>>, %arg6: memref<32x32xf32, #tpu.memory_space<vmem>>, %arg7: memref<1x32xf32, #tpu.memory_space<vmem>>, %arg8: memref<8x32xf32, #tpu.memory_space<vmem>>) attributes {dimension_semantics = [#tpu.dimension_semantics<parallel>], iteration_bounds = array<i64: 2>, scalar_prefetch = 0 : i64, scratch_operands = 0 : i64, tpu.core_type = #tpu.core_type<tc>, window_params = [{transform_indices = @transform_0, window_bounds = array<i64: 8, 32>}, {transform_indices = @transform_1, window_bounds = array<i64: 8, 32>}, {transform_indices = @transform_2, window_bounds = array<i64: 8, 32>}, {pipeline_mode = #tpu.pipeline_mode<synchronous>, transform_indices = @transform_3, window_bounds = array<i64: 96, 32>}, {pipeline_mode = #tpu.pipeline_mode<synchronous>, transform_indices = @transform_4, window_bounds = array<i64: 3, 32>}, {pipeline_mode = #tpu.pipeline_mode<synchronous>, transform_indices = @transform_5, window_bounds = array<i64: 32, 32>}, {pipeline_mode = #tpu.pipeline_mode<synchronous>, transform_indices = @transform_6, window_bounds = array<i64: 1, 32>}, {transform_indices = @transform_7, window_bounds = array<i64: 8, 32>}]} {
    %c0 = arith.constant 0 : index
    %c0_0 = arith.constant 0 : index
    %0 = vector.load %arg1[%c0, %c0_0] : memref<8x32xf32, #tpu.memory_space<vmem>>, vector<8x32xf32>
    %c0_1 = arith.constant 0 : index
    %c0_2 = arith.constant 0 : index
    %1 = vector.load %arg2[%c0_1, %c0_2] : memref<8x32xf32, #tpu.memory_space<vmem>>, vector<8x32xf32>
    %c0_3 = arith.constant 0 : index
    %c0_4 = arith.constant 0 : index
    %2 = vector.load %arg3[%c0_3, %c0_4] : memref<8x32xf32, #tpu.memory_space<vmem>>, vector<8x32xf32>
    %c0_5 = arith.constant 0 : index
    %c0_6 = arith.constant 0 : index
    %3 = vector.load %arg4[%c0_5, %c0_6] : memref<96x32xf32, #tpu.memory_space<vmem>>, vector<32x32xf32>
    %cst = arith.constant dense<0.000000e+00> : vector<8x32xf32>
    %4 = tpu.matmul %0, %3, %cst {dimension_numbers = #tpu.dot_dimension_numbers<[1], [1], [0], [0], [0, 0, 1, 0], [], []>} : vector<8x32xf32>, vector<32x32xf32>, vector<8x32xf32> -> vector<8x32xf32>
    %c0_7 = arith.constant 0 : index
    %c0_8 = arith.constant 0 : index
    %5 = vector.load %arg5[%c0_7, %c0_8] : memref<3x32xf32, #tpu.memory_space<vmem>>, vector<1x32xf32>
    %6 = vector.broadcast %5 : vector<1x32xf32> to vector<8x32xf32>
    %7 = arith.addf %4, %6 : vector<8x32xf32>
    %cst_9 = arith.constant 0.353553385 : f32
    %8 = vector.broadcast %cst_9 : f32 to vector<8x32xf32>
    %9 = arith.mulf %7, %8 : vector<8x32xf32>
    %c32 = arith.constant 32 : index
    %c0_10 = arith.constant 0 : index
    %10 = vector.load %arg4[%c32, %c0_10] : memref<96x32xf32, #tpu.memory_space<vmem>>, vector<32x32xf32>
    %cst_11 = arith.constant dense<0.000000e+00> : vector<8x32xf32>
    %11 = tpu.matmul %1, %10, %cst_11 {dimension_numbers = #tpu.dot_dimension_numbers<[1], [1], [0], [0], [0, 0, 1, 0], [], []>} : vector<8x32xf32>, vector<32x32xf32>, vector<8x32xf32> -> vector<8x32xf32>
    %c1 = arith.constant 1 : index
    %c0_12 = arith.constant 0 : index
    %12 = vector.load %arg5[%c1, %c0_12] : memref<3x32xf32, #tpu.memory_space<vmem>>, vector<1x32xf32>
    %13 = vector.broadcast %12 : vector<1x32xf32> to vector<8x32xf32>
    %14 = arith.addf %11, %13 : vector<8x32xf32>
    %c64 = arith.constant 64 : index
    %c0_13 = arith.constant 0 : index
    %15 = vector.load %arg4[%c64, %c0_13] : memref<96x32xf32, #tpu.memory_space<vmem>>, vector<32x32xf32>
    %cst_14 = arith.constant dense<0.000000e+00> : vector<8x32xf32>
    %16 = tpu.matmul %2, %15, %cst_14 {dimension_numbers = #tpu.dot_dimension_numbers<[1], [1], [0], [0], [0, 0, 1, 0], [], []>} : vector<8x32xf32>, vector<32x32xf32>, vector<8x32xf32> -> vector<8x32xf32>
    %c2 = arith.constant 2 : index
    %c0_15 = arith.constant 0 : index
    %17 = vector.load %arg5[%c2, %c0_15] : memref<3x32xf32, #tpu.memory_space<vmem>>, vector<1x32xf32>
    %18 = vector.broadcast %17 : vector<1x32xf32> to vector<8x32xf32>
    %19 = arith.addf %16, %18 : vector<8x32xf32>
    %20 = vector.extract_strided_slice %9 {offsets = [0, 0], sizes = [8, 8], strides = [1, 1]} : vector<8x32xf32> to vector<8x8xf32>
    %21 = vector.extract_strided_slice %14 {offsets = [0, 0], sizes = [8, 8], strides = [1, 1]} : vector<8x32xf32> to vector<8x8xf32>
    %22 = vector.extract_strided_slice %19 {offsets = [0, 0], sizes = [8, 8], strides = [1, 1]} : vector<8x32xf32> to vector<8x8xf32>
    %cst_16 = arith.constant dense<0.000000e+00> : vector<8x8xf32>
    %23 = tpu.matmul %20, %21, %cst_16 {dimension_numbers = #tpu.dot_dimension_numbers<[1], [1], [0], [0], [0, 0, 1, 0], [], []>} : vector<8x8xf32>, vector<8x8xf32>, vector<8x8xf32> -> vector<8x8xf32>
    %cst_17 = arith.constant dense<0xFF800000> : vector<8xf32>
    %24 = vector.multi_reduction <maximumf>, %23, %cst_17 [1] : vector<8x8xf32> to vector<8xf32>
    %25 = vector.shape_cast %24 : vector<8xf32> to vector<8x1xf32>
    %26 = vector.broadcast %25 : vector<8x1xf32> to vector<8x8xf32>
    %27 = arith.subf %23, %26 : vector<8x8xf32>
    %28 = math.exp %27 : vector<8x8xf32>
    %cst_18 = arith.constant dense<0.000000e+00> : vector<8xf32>
    %29 = vector.multi_reduction <add>, %28, %cst_18 [1] : vector<8x8xf32> to vector<8xf32>
    %30 = vector.shape_cast %29 : vector<8xf32> to vector<8x1xf32>
    %cst_19 = arith.constant 1.000000e+00 : f32
    %31 = vector.broadcast %cst_19 : f32 to vector<8x1xf32>
    %32 = arith.divf %31, %30 : vector<8x1xf32>
    %33 = vector.broadcast %32 : vector<8x1xf32> to vector<8x8xf32>
    %34 = arith.mulf %28, %33 : vector<8x8xf32>
    %cst_20 = arith.constant dense<0.000000e+00> : vector<8x8xf32>
    %35 = tpu.matmul %34, %22, %cst_20 {dimension_numbers = #tpu.dot_dimension_numbers<[1], [0], [0], [1], [0, 0, 1, 1], [], []>} : vector<8x8xf32>, vector<8x8xf32>, vector<8x8xf32> -> vector<8x8xf32>
    %36 = vector.extract_strided_slice %9 {offsets = [0, 8], sizes = [8, 8], strides = [1, 1]} : vector<8x32xf32> to vector<8x8xf32>
    %37 = vector.extract_strided_slice %14 {offsets = [0, 8], sizes = [8, 8], strides = [1, 1]} : vector<8x32xf32> to vector<8x8xf32>
    %38 = vector.extract_strided_slice %19 {offsets = [0, 8], sizes = [8, 8], strides = [1, 1]} : vector<8x32xf32> to vector<8x8xf32>
    %cst_21 = arith.constant dense<0.000000e+00> : vector<8x8xf32>
    %39 = tpu.matmul %36, %37, %cst_21 {dimension_numbers = #tpu.dot_dimension_numbers<[1], [1], [0], [0], [0, 0, 1, 0], [], []>} : vector<8x8xf32>, vector<8x8xf32>, vector<8x8xf32> -> vector<8x8xf32>
    %cst_22 = arith.constant dense<0xFF800000> : vector<8xf32>
    %40 = vector.multi_reduction <maximumf>, %39, %cst_22 [1] : vector<8x8xf32> to vector<8xf32>
    %41 = vector.shape_cast %40 : vector<8xf32> to vector<8x1xf32>
    %42 = vector.broadcast %41 : vector<8x1xf32> to vector<8x8xf32>
    %43 = arith.subf %39, %42 : vector<8x8xf32>
    %44 = math.exp %43 : vector<8x8xf32>
    %cst_23 = arith.constant dense<0.000000e+00> : vector<8xf32>
    %45 = vector.multi_reduction <add>, %44, %cst_23 [1] : vector<8x8xf32> to vector<8xf32>
    %46 = vector.shape_cast %45 : vector<8xf32> to vector<8x1xf32>
    %cst_24 = arith.constant 1.000000e+00 : f32
    %47 = vector.broadcast %cst_24 : f32 to vector<8x1xf32>
    %48 = arith.divf %47, %46 : vector<8x1xf32>
    %49 = vector.broadcast %48 : vector<8x1xf32> to vector<8x8xf32>
    %50 = arith.mulf %44, %49 : vector<8x8xf32>
    %cst_25 = arith.constant dense<0.000000e+00> : vector<8x8xf32>
    %51 = tpu.matmul %50, %38, %cst_25 {dimension_numbers = #tpu.dot_dimension_numbers<[1], [0], [0], [1], [0, 0, 1, 1], [], []>} : vector<8x8xf32>, vector<8x8xf32>, vector<8x8xf32> -> vector<8x8xf32>
    %52 = vector.extract_strided_slice %9 {offsets = [0, 16], sizes = [8, 8], strides = [1, 1]} : vector<8x32xf32> to vector<8x8xf32>
    %53 = vector.extract_strided_slice %14 {offsets = [0, 16], sizes = [8, 8], strides = [1, 1]} : vector<8x32xf32> to vector<8x8xf32>
    %54 = vector.extract_strided_slice %19 {offsets = [0, 16], sizes = [8, 8], strides = [1, 1]} : vector<8x32xf32> to vector<8x8xf32>
    %cst_26 = arith.constant dense<0.000000e+00> : vector<8x8xf32>
    %55 = tpu.matmul %52, %53, %cst_26 {dimension_numbers = #tpu.dot_dimension_numbers<[1], [1], [0], [0], [0, 0, 1, 0], [], []>} : vector<8x8xf32>, vector<8x8xf32>, vector<8x8xf32> -> vector<8x8xf32>
    %cst_27 = arith.constant dense<0xFF800000> : vector<8xf32>
    %56 = vector.multi_reduction <maximumf>, %55, %cst_27 [1] : vector<8x8xf32> to vector<8xf32>
    %57 = vector.shape_cast %56 : vector<8xf32> to vector<8x1xf32>
    %58 = vector.broadcast %57 : vector<8x1xf32> to vector<8x8xf32>
    %59 = arith.subf %55, %58 : vector<8x8xf32>
    %60 = math.exp %59 : vector<8x8xf32>
    %cst_28 = arith.constant dense<0.000000e+00> : vector<8xf32>
    %61 = vector.multi_reduction <add>, %60, %cst_28 [1] : vector<8x8xf32> to vector<8xf32>
    %62 = vector.shape_cast %61 : vector<8xf32> to vector<8x1xf32>
    %cst_29 = arith.constant 1.000000e+00 : f32
    %63 = vector.broadcast %cst_29 : f32 to vector<8x1xf32>
    %64 = arith.divf %63, %62 : vector<8x1xf32>
    %65 = vector.broadcast %64 : vector<8x1xf32> to vector<8x8xf32>
    %66 = arith.mulf %60, %65 : vector<8x8xf32>
    %cst_30 = arith.constant dense<0.000000e+00> : vector<8x8xf32>
    %67 = tpu.matmul %66, %54, %cst_30 {dimension_numbers = #tpu.dot_dimension_numbers<[1], [0], [0], [1], [0, 0, 1, 1], [], []>} : vector<8x8xf32>, vector<8x8xf32>, vector<8x8xf32> -> vector<8x8xf32>
    %68 = vector.extract_strided_slice %9 {offsets = [0, 24], sizes = [8, 8], strides = [1, 1]} : vector<8x32xf32> to vector<8x8xf32>
    %69 = vector.extract_strided_slice %14 {offsets = [0, 24], sizes = [8, 8], strides = [1, 1]} : vector<8x32xf32> to vector<8x8xf32>
    %70 = vector.extract_strided_slice %19 {offsets = [0, 24], sizes = [8, 8], strides = [1, 1]} : vector<8x32xf32> to vector<8x8xf32>
    %cst_31 = arith.constant dense<0.000000e+00> : vector<8x8xf32>
    %71 = tpu.matmul %68, %69, %cst_31 {dimension_numbers = #tpu.dot_dimension_numbers<[1], [1], [0], [0], [0, 0, 1, 0], [], []>} : vector<8x8xf32>, vector<8x8xf32>, vector<8x8xf32> -> vector<8x8xf32>
    %cst_32 = arith.constant dense<0xFF800000> : vector<8xf32>
    %72 = vector.multi_reduction <maximumf>, %71, %cst_32 [1] : vector<8x8xf32> to vector<8xf32>
    %73 = vector.shape_cast %72 : vector<8xf32> to vector<8x1xf32>
    %74 = vector.broadcast %73 : vector<8x1xf32> to vector<8x8xf32>
    %75 = arith.subf %71, %74 : vector<8x8xf32>
    %76 = math.exp %75 : vector<8x8xf32>
    %cst_33 = arith.constant dense<0.000000e+00> : vector<8xf32>
    %77 = vector.multi_reduction <add>, %76, %cst_33 [1] : vector<8x8xf32> to vector<8xf32>
    %78 = vector.shape_cast %77 : vector<8xf32> to vector<8x1xf32>
    %cst_34 = arith.constant 1.000000e+00 : f32
    %79 = vector.broadcast %cst_34 : f32 to vector<8x1xf32>
    %80 = arith.divf %79, %78 : vector<8x1xf32>
    %81 = vector.broadcast %80 : vector<8x1xf32> to vector<8x8xf32>
    %82 = arith.mulf %76, %81 : vector<8x8xf32>
    %cst_35 = arith.constant dense<0.000000e+00> : vector<8x8xf32>
    %83 = tpu.matmul %82, %70, %cst_35 {dimension_numbers = #tpu.dot_dimension_numbers<[1], [0], [0], [1], [0, 0, 1, 1], [], []>} : vector<8x8xf32>, vector<8x8xf32>, vector<8x8xf32> -> vector<8x8xf32>
    %84 = tpu.concatenate %35, %51, %67, %83 in 1 : vector<8x8xf32>, vector<8x8xf32>, vector<8x8xf32>, vector<8x8xf32> -> vector<8x32xf32>
    %c0_36 = arith.constant 0 : index
    %c0_37 = arith.constant 0 : index
    %85 = vector.load %arg6[%c0_36, %c0_37] : memref<32x32xf32, #tpu.memory_space<vmem>>, vector<32x32xf32>
    %cst_38 = arith.constant dense<0.000000e+00> : vector<8x32xf32>
    %86 = tpu.matmul %84, %85, %cst_38 {dimension_numbers = #tpu.dot_dimension_numbers<[1], [1], [0], [0], [0, 0, 1, 0], [], []>} : vector<8x32xf32>, vector<32x32xf32>, vector<8x32xf32> -> vector<8x32xf32>
    %c0_39 = arith.constant 0 : index
    %c0_40 = arith.constant 0 : index
    %87 = vector.load %arg7[%c0_39, %c0_40] : memref<1x32xf32, #tpu.memory_space<vmem>>, vector<1x32xf32>
    %88 = vector.broadcast %87 : vector<1x32xf32> to vector<8x32xf32>
    %89 = arith.addf %86, %88 : vector<8x32xf32>
    %c0_41 = arith.constant 0 : index
    %c0_42 = arith.constant 0 : index
    %90 = vector.load %arg8[%c0_41, %c0_42] : memref<8x32xf32, #tpu.memory_space<vmem>>, vector<8x32xf32>
    tpu.vector_store %arg8[%c0_41, %c0_42], %89 {strides = array<i32>} : memref<8x32xf32, #tpu.memory_space<vmem>>, vector<8x32xf32>,
    return
  }
  func.func @transform_0(%arg0: i32) -> (i32, i32) {
    %c0_i32 = arith.constant 0 : i32
    %c0_i32_0 = arith.constant 0 : i32
    return %arg0, %c0_i32 : i32, i32
  }
  func.func @transform_1(%arg0: i32) -> (i32, i32) {
    %c0_i32 = arith.constant 0 : i32
    %c0_i32_0 = arith.constant 0 : i32
    return %arg0, %c0_i32 : i32, i32
  }
  func.func @transform_2(%arg0: i32) -> (i32, i32) {
    %c0_i32 = arith.constant 0 : i32
    %c0_i32_0 = arith.constant 0 : i32
    return %arg0, %c0_i32 : i32, i32
  }
  func.func @transform_3(%arg0: i32) -> (i32, i32) {
    %c0_i32 = arith.constant 0 : i32
    %c0_i32_0 = arith.constant 0 : i32
    %c0_i32_1 = arith.constant 0 : i32
    return %c0_i32, %c0_i32_0 : i32, i32
  }
  func.func @transform_4(%arg0: i32) -> (i32, i32) {
    %c0_i32 = arith.constant 0 : i32
    %c0_i32_0 = arith.constant 0 : i32
    %c0_i32_1 = arith.constant 0 : i32
    return %c0_i32, %c0_i32_0 : i32, i32
  }
  func.func @transform_5(%arg0: i32) -> (i32, i32) {
    %c0_i32 = arith.constant 0 : i32
    %c0_i32_0 = arith.constant 0 : i32
    %c0_i32_1 = arith.constant 0 : i32
    return %c0_i32, %c0_i32_0 : i32, i32
  }
  func.func @transform_6(%arg0: i32) -> (i32, i32) {
    %c0_i32 = arith.constant 0 : i32
    %c0_i32_0 = arith.constant 0 : i32
    %c0_i32_1 = arith.constant 0 : i32
    return %c0_i32, %c0_i32_0 : i32, i32
  }
  func.func @transform_7(%arg0: i32) -> (i32, i32) {
    %c0_i32 = arith.constant 0 : i32
    %c0_i32_0 = arith.constant 0 : i32
    return %arg0, %c0_i32 : i32, i32
  }
}

</mosaic_0001>

<llo_original>
// kernel: tpu_custom_call.1
$region0: #{tpu_custom_call.1}
  #allocation0 [shape = 'u32[]', space=smem, size = 0x4, offset = 0x4, fixed_abs, tag = 'smem constant byte address 0x4 - core index']
  #allocation1 [shape = 'u32[144,128]{1,0:T(1,128)}', space=vmem, size = 0x12000, scoped, tag = 'internal scratch']
  %s0 = inlined_call_operand.vmem [shape: f32[16,32], index: 0, kind: input, shape index: {}]
  %s1 = inlined_call_operand.vmem [shape: f32[16,32], index: 1, kind: input, shape index: {}]
  %s2 = inlined_call_operand.vmem [shape: f32[16,32], index: 2, kind: input, shape index: {}]
  %s3 = inlined_call_operand.vmem [shape: f32[96,32], index: 3, kind: input, shape index: {}]
  %s4 = inlined_call_operand.vmem [shape: f32[3,32], index: 4, kind: input, shape index: {}]
  %s5 = inlined_call_operand.vmem [shape: f32[32,32], index: 5, kind: input, shape index: {}]
  %s6 = inlined_call_operand.vmem [shape: f32[1,32], index: 6, kind: input, shape index: {}]
  %s7 = inlined_call_operand.hbm [shape: f32[16,32], index: 7, kind: output, shape index: {}]
  %s8 = sld [smem:[#allocation0]]
  $region61: #{tpu_custom_call.1} parent=0
    _
  %s10 = ssub.s32 1, %s8
  %s11 = scalar_select 0, %s10, %s8
  $region1: #{tpu_custom_call.1} parent=0
    #allocation2 [shape = 'u8[8192]{0}', space=vmem, size = 0x2000, scoped, tag = 'output window, operand 0']
    #allocation3 [shape = 's32[2]{0}', space=sflag, size = 0x8, scoped, tag = 'scoped memory for tpu_custom_call.1']
    %12 = vsyncpa [#allocation3], 0
    %s13 = scalar_lea.sflag [#allocation3], 1
    %14 = vsyncpa %s13, 0
    loop: start=0, step=1, limit=4
    $region2: #{tpu_custom_call.1} parent=1 // loop_pre_header
      _
    $region3: #{tpu_custom_call.1} parent=1 // loop_header
      %s16 = sphi 0, %s20
      %p17 = scmp.ge.s32.totalorder %s16, 4
      %s26 = sphi 0, %s28
      %s29 = sphi 0, %s26
      %s30 = sphi 0, %s29
      %s46 = sphi 0, %s30
      %s52 = sphi 0, %s54
      %s55 = sphi 0, %s52
      %s56 = sphi 0, %s55
      %s72 = sphi 0, %s56
      %s78 = sphi 0, %s80
      %s81 = sphi 0, %s78
      %s82 = sphi 0, %s81
      %s98 = sphi 0, %s82
      %s102 = sphi 0, %s102
      %s104 = sphi 0, %s102
      %s105 = sphi 0, %s104
      %s119 = sphi 0, %s105
      %s123 = sphi 0, %s123
      %s125 = sphi 0, %s123
      %s126 = sphi 0, %s125
      %s140 = sphi 0, %s126
      %s144 = sphi 0, %s144
      %s146 = sphi 0, %s144
      %s147 = sphi 0, %s146
      %s161 = sphi 0, %s147
      %s165 = sphi 0, %s165
      %s167 = sphi 0, %s165
      %s168 = sphi 0, %s167
      %s182 = sphi 0, %s168
      %s188 = sphi 0, %s190
      %s191 = sphi 0, %s188
      %s192 = sphi 0, %s191
      %s208 = sphi 0, %s192
    $region4: #{tpu_custom_call.1} parent=1 // loop_header_branch
      %19 = sbr.rel (%p17) target = $region8
    $region5: #{tpu_custom_call.1} parent=1 // loop_body
      %s21 = ssub.s32 %s16, 1
      %s22 = ssub.s32 %s16, 2
      %s23 = sadd.s32 %s16, 1
      %s24 = ssub.s32 %s16, %s23
      %p25 = scmp.eq.s32.totalorder %s24, 0
      %s27 = sadd.s32 %s26, 1
      %s28 = scalar_select %p25, %s26, %s27
      %p31 = pneg %p25
      %p32 = scmp.eq.s32.totalorder %s16, 1
      %p33 = por %p31, %p32
      %p34 = scmp.ne.s32.totalorder %s26, %s29
      %p35 = scmp.eq.s32.totalorder %s16, 0
      %p36 = por %p34, %p35
      %p37 = scmp.ne.s32.totalorder %s26, %s29
      %p38 = scmp.eq.s32.totalorder %s21, 1
      %p39 = por %p37, %p38
      %p40 = scmp.ne.s32.totalorder %s29, %s30
      %p41 = scmp.eq.s32.totalorder %s21, 0
      %p42 = por %p40, %p41
      %p43 = scmp.ne.s32.totalorder %s29, %s30
      %p44 = scmp.eq.s32.totalorder %s22, 1
      %p45 = por %p43, %p44
      %p47 = scmp.ne.s32.totalorder %s30, %s46
      %p48 = scmp.eq.s32.totalorder %s22, 0
      %p49 = por %p47, %p48
      %s50 = ssub.s32 %s16, %s23
      %p51 = scmp.eq.s32.totalorder %s50, 0
      %s53 = sadd.s32 %s52, 1
      %s54 = scalar_select %p51, %s52, %s53
      %p57 = pneg %p51
      %p58 = scmp.eq.s32.totalorder %s16, 1
      %p59 = por %p57, %p58
      %p60 = scmp.ne.s32.totalorder %s52, %s55
      %p61 = scmp.eq.s32.totalorder %s16, 0
      %p62 = por %p60, %p61
      %p63 = scmp.ne.s32.totalorder %s52, %s55
      %p64 = scmp.eq.s32.totalorder %s21, 1
      %p65 = por %p63, %p64
      %p66 = scmp.ne.s32.totalorder %s55, %s56
      %p67 = scmp.eq.s32.totalorder %s21, 0
      %p68 = por %p66, %p67
      %p69 = scmp.ne.s32.totalorder %s55, %s56
      %p70 = scmp.eq.s32.totalorder %s22, 1
      %p71 = por %p69, %p70
      %p73 = scmp.ne.s32.totalorder %s56, %s72
      %p74 = scmp.eq.s32.totalorder %s22, 0
      %p75 = por %p73, %p74
      %s76 = ssub.s32 %s16, %s23
      %p77 = scmp.eq.s32.totalorder %s76, 0
      %s79 = sadd.s32 %s78, 1
      %s80 = scalar_select %p77, %s78, %s79
      %p83 = pneg %p77
      %p84 = scmp.eq.s32.totalorder %s16, 1
      %p85 = por %p83, %p84
      %p86 = scmp.ne.s32.totalorder %s78, %s81
      %p87 = scmp.eq.s32.totalorder %s16, 0
      %p88 = por %p86, %p87
      %p89 = scmp.ne.s32.totalorder %s78, %s81
      %p90 = scmp.eq.s32.totalorder %s21, 1
      %p91 = por %p89, %p90
      %p92 = scmp.ne.s32.totalorder %s81, %s82
      %p93 = scmp.eq.s32.totalorder %s21, 0
      %p94 = por %p92, %p93
      %p95 = scmp.ne.s32.totalorder %s81, %s82
      %p96 = scmp.eq.s32.totalorder %s22, 1
      %p97 = por %p95, %p96
      %p99 = scmp.ne.s32.totalorder %s82, %s98
      %p100 = scmp.eq.s32.totalorder %s22, 0
      %p101 = por %p99, %p100
      %s103 = sadd.s32 %s102, 1
      %p106 = scmp.eq.s32.totalorder %s16, 1
      %p107 = scmp.ne.s32.totalorder %s102, %s104
      %p108 = scmp.eq.s32.totalorder %s16, 0
      %p109 = por %p107, %p108
      %p110 = scmp.ne.s32.totalorder %s102, %s104
      %p111 = scmp.eq.s32.totalorder %s21, 1
      %p112 = por %p110, %p111
      %p113 = scmp.ne.s32.totalorder %s104, %s105
      %p114 = scmp.eq.s32.totalorder %s21, 0
      %p115 = por %p113, %p114
      %p116 = scmp.ne.s32.totalorder %s104, %s105
      %p117 = scmp.eq.s32.totalorder %s22, 1
      %p118 = por %p116, %p117
      %p120 = scmp.ne.s32.totalorder %s105, %s119
      %p121 = scmp.eq.s32.totalorder %s22, 0
      %p122 = por %p120, %p121
      %s124 = sadd.s32 %s123, 1
      %p127 = scmp.eq.s32.totalorder %s16, 1
      %p128 = scmp.ne.s32.totalorder %s123, %s125
      %p129 = scmp.eq.s32.totalorder %s16, 0
      %p130 = por %p128, %p129
      %p131 = scmp.ne.s32.totalorder %s123, %s125
      %p132 = scmp.eq.s32.totalorder %s21, 1
      %p133 = por %p131, %p132
      %p134 = scmp.ne.s32.totalorder %s125, %s126
      %p135 = scmp.eq.s32.totalorder %s21, 0
      %p136 = por %p134, %p135
      %p137 = scmp.ne.s32.totalorder %s125, %s126
      %p138 = scmp.eq.s32.totalorder %s22, 1
      %p139 = por %p137, %p138
      %p141 = scmp.ne.s32.totalorder %s126, %s140
      %p142 = scmp.eq.s32.totalorder %s22, 0
      %p143 = por %p141, %p142
      %s145 = sadd.s32 %s144, 1
      %p148 = scmp.eq.s32.totalorder %s16, 1
      %p149 = scmp.ne.s32.totalorder %s144, %s146
      %p150 = scmp.eq.s32.totalorder %s16, 0
      %p151 = por %p149, %p150
      %p152 = scmp.ne.s32.totalorder %s144, %s146
      %p153 = scmp.eq.s32.totalorder %s21, 1
      %p154 = por %p152, %p153
      %p155 = scmp.ne.s32.totalorder %s146, %s147
      %p156 = scmp.eq.s32.totalorder %s21, 0
      %p157 = por %p155, %p156
      %p158 = scmp.ne.s32.totalorder %s146, %s147
      %p159 = scmp.eq.s32.totalorder %s22, 1
      %p160 = por %p158, %p159
      %p162 = scmp.ne.s32.totalorder %s147, %s161
      %p163 = scmp.eq.s32.totalorder %s22, 0
      %p164 = por %p162, %p163
      %s166 = sadd.s32 %s165, 1
      %p169 = scmp.eq.s32.totalorder %s16, 1
      %p170 = scmp.ne.s32.totalorder %s165, %s167
      %p171 = scmp.eq.s32.totalorder %s16, 0
      %p172 = por %p170, %p171
      %p173 = scmp.ne.s32.totalorder %s165, %s167
      %p174 = scmp.eq.s32.totalorder %s21, 1
      %p175 = por %p173, %p174
      %p176 = scmp.ne.s32.totalorder %s167, %s168
      %p177 = scmp.eq.s32.totalorder %s21, 0
      %p178 = por %p176, %p177
      %p179 = scmp.ne.s32.totalorder %s167, %s168
      %p180 = scmp.eq.s32.totalorder %s22, 1
      %p181 = por %p179, %p180
      %p183 = scmp.ne.s32.totalorder %s168, %s182
      %p184 = scmp.eq.s32.totalorder %s22, 0
      %p185 = por %p183, %p184
      %s186 = ssub.s32 %s16, %s23
      %p187 = scmp.eq.s32.totalorder %s186, 0
      %s189 = sadd.s32 %s188, 1
      %s190 = scalar_select %p187, %s188, %s189
      %p193 = pneg %p187
      %p194 = scmp.eq.s32.totalorder %s16, 1
      %p195 = por %p193, %p194
      %p196 = scmp.ne.s32.totalorder %s188, %s191
      %p197 = scmp.eq.s32.totalorder %s16, 0
      %p198 = por %p196, %p197
      %p199 = scmp.ne.s32.totalorder %s188, %s191
      %p200 = scmp.eq.s32.totalorder %s21, 1
      %p201 = por %p199, %p200
      %p202 = scmp.ne.s32.totalorder %s191, %s192
      %p203 = scmp.eq.s32.totalorder %s21, 0
      %p204 = por %p202, %p203
      %p205 = scmp.ne.s32.totalorder %s191, %s192
      %p206 = scmp.eq.s32.totalorder %s22, 1
      %p207 = por %p205, %p206
      %p209 = scmp.ne.s32.totalorder %s192, %s208
      %p210 = scmp.eq.s32.totalorder %s22, 0
      %p211 = por %p209, %p210
      %p212 = scmp.le.s32.totalorder 1, %s16
      %p213 = scmp.lt.s32.totalorder %s16, 3
      %p214 = pnand %p212, %p213
      %p215 = pneg %p214
      // Predicated region
      $region9: #{tpu_custom_call.1} parent=5 // pred_check
        _
      $region10: #{tpu_custom_call.1} parent=5 // pred_check_branch
        %217 = sbr.rel (%p214) target = $region12
      $region11: #{tpu_custom_call.1} parent=5 // pred_region
        %s218 = ssub.s32 %s16, 1
        // Predicated region
        $region13: #{tpu_custom_call.1} parent=11 // pred_check
          %p219 = pneg %p115
        $region14: #{tpu_custom_call.1} parent=11 // pred_check_branch
          %221 = sbr.rel (%p219) target = $region16
        $region15: #{tpu_custom_call.1} parent=11 // pred_region
          _
        $region16: #{tpu_custom_call.1} parent=11 // pred_fallthru
          _
        // Predicated region
        $region17: #{tpu_custom_call.1} parent=11 // pred_check
          %p222 = pneg %p136
        $region18: #{tpu_custom_call.1} parent=11 // pred_check_branch
          %224 = sbr.rel (%p222) target = $region20
        $region19: #{tpu_custom_call.1} parent=11 // pred_region
          _
        $region20: #{tpu_custom_call.1} parent=11 // pred_fallthru
          _
        // Predicated region
        $region21: #{tpu_custom_call.1} parent=11 // pred_check
          %p225 = pneg %p157
        $region22: #{tpu_custom_call.1} parent=11 // pred_check_branch
          %227 = sbr.rel (%p225) target = $region24
        $region23: #{tpu_custom_call.1} parent=11 // pred_region
          _
        $region24: #{tpu_custom_call.1} parent=11 // pred_fallthru
          _
        // Predicated region
        $region25: #{tpu_custom_call.1} parent=11 // pred_check
          %p228 = pneg %p178
        $region26: #{tpu_custom_call.1} parent=11 // pred_check_branch
          %230 = sbr.rel (%p228) target = $region28
        $region27: #{tpu_custom_call.1} parent=11 // pred_region
          _
        $region28: #{tpu_custom_call.1} parent=11 // pred_fallthru
          _
      $region12: #{tpu_custom_call.1} parent=5 // pred_fallthru
        _
      %p231 = scmp.lt.s32.totalorder %s16, 2
      // Predicated region
      $region29: #{tpu_custom_call.1} parent=5 // pred_check
        %p232 = pneg %p231
      $region30: #{tpu_custom_call.1} parent=5 // pred_check_branch
        %234 = sbr.rel (%p232) target = $region32
      $region31: #{tpu_custom_call.1} parent=5 // pred_region
        // Predicated region
        $region33: #{tpu_custom_call.1} parent=31 // pred_check
          %p235 = pneg %p36
        $region34: #{tpu_custom_call.1} parent=31 // pred_check_branch
          %237 = sbr.rel (%p235) target = $region36
        $region35: #{tpu_custom_call.1} parent=31 // pred_region
          %p238 = scmp.lt.s32.totalorder %s16, 1
          %s239 = scalar_select %p238, %s16, 1
          %s240 = smul.addr %s239, 8
          %s241 = scalar_lea.vmem %s0, %s240
        $region36: #{tpu_custom_call.1} parent=31 // pred_fallthru
          _
        // Predicated region
        $region37: #{tpu_custom_call.1} parent=31 // pred_check
          %p242 = pneg %p62
        $region38: #{tpu_custom_call.1} parent=31 // pred_check_branch
          %244 = sbr.rel (%p242) target = $region40
        $region39: #{tpu_custom_call.1} parent=31 // pred_region
          %p245 = scmp.lt.s32.totalorder %s16, 1
          %s246 = scalar_select %p245, %s16, 1
          %s247 = smul.addr %s246, 8
          %s248 = scalar_lea.vmem %s1, %s247
        $region40: #{tpu_custom_call.1} parent=31 // pred_fallthru
          _
        // Predicated region
        $region41: #{tpu_custom_call.1} parent=31 // pred_check
          %p249 = pneg %p88
        $region42: #{tpu_custom_call.1} parent=31 // pred_check_branch
          %251 = sbr.rel (%p249) target = $region44
        $region43: #{tpu_custom_call.1} parent=31 // pred_region
          %p252 = scmp.lt.s32.totalorder %s16, 1
          %s253 = scalar_select %p252, %s16, 1
          %s254 = smul.addr %s253, 8
          %s255 = scalar_lea.vmem %s2, %s254
        $region44: #{tpu_custom_call.1} parent=31 // pred_fallthru
          _
      $region32: #{tpu_custom_call.1} parent=5 // pred_fallthru
        _
      %p256 = scmp.le.s32.totalorder 1, %s16
      %p257 = scmp.lt.s32.totalorder %s16, 3
      %p258 = pnand %p256, %p257
      %p259 = pneg %p258
      // Predicated region
      $region45: #{tpu_custom_call.1} parent=5 // pred_check
        _
      $region46: #{tpu_custom_call.1} parent=5 // pred_check_branch
        %261 = sbr.rel (%p258) target = $region48
      $region47: #{tpu_custom_call.1} parent=5 // pred_region
        %s262 = ssub.s32 %s16, 1
        %p263 = scmp.lt.s32.totalorder %s21, 1
        %s264 = scalar_select %p263, %s21, 1
        %s265 = smul.addr %s264, 8
        %s266 = scalar_lea.vmem %s0, %s265
        %p267 = pneg %p42
        %p268 = pneg %p39
        %p269 = scmp.lt.s32.totalorder %s21, 1
        %s270 = scalar_select %p269, %s21, 1
        %s271 = smul.addr %s270, 8
        %s272 = scalar_lea.vmem %s1, %s271
        %p273 = pneg %p68
        %p274 = pneg %p65
        %p275 = scmp.lt.s32.totalorder %s21, 1
        %s276 = scalar_select %p275, %s21, 1
        %s277 = smul.addr %s276, 8
        %s278 = scalar_lea.vmem %s2, %s277
        %p279 = pneg %p94
        %p280 = pneg %p91
        %p281 = pneg %p115
        %p282 = pneg %p112
        %p283 = pneg %p136
        %p284 = pneg %p133
        %p285 = pneg %p157
        %p286 = pneg %p154
        %p287 = pneg %p178
        %p288 = pneg %p175
        %p289 = pneg %p204
        %p290 = pneg %p201
        %s291 = sand.u32 %s191, 1
        %s292 = scalar_lea.sflag [#allocation3], %s291
        %s293 = sand.u32 %s191, 1
        %s294 = smul.addr %s293, 8
        %s295 = scalar_lea.vmem [#allocation2], %s294
        %p296 = scmp.lt.s32.totalorder %s21, 1
        %s297 = scalar_select %p296, %s21, 1
        %s298 = smul.addr %s297, 8
        %s299 = scalar_lea.vmem %s0, %s298
        %p300 = scmp.lt.s32.totalorder %s21, 1
        %s301 = scalar_select %p300, %s21, 1
        %s302 = smul.addr %s301, 8
        %s303 = scalar_lea.vmem %s1, %s302
        %p304 = scmp.lt.s32.totalorder %s21, 1
        %s305 = scalar_select %p304, %s21, 1
        %s306 = smul.addr %s305, 8
        %s307 = scalar_lea.vmem %s2, %s306
        %v308 = vld [vmem:[%s299] sm:$0xff]
        %v309 = vld [vmem:[%s303] sm:$0xff]
        %v310 = vld [vmem:[%s307] sm:$0xff]
        %v311 = vld [vmem:[%s3] sm:$0xff]
        %v312 = vld [vmem:[%s3 + $0x8] sm:$0xff]
        %v313 = vld [vmem:[%s3 + $0x10] sm:$0xff]
        %v314 = vld [vmem:[%s3 + $0x18] sm:$0xff]
        %v315 = vld [vmem:[%s4] sm:$0x1]
        %v316 = vlaneseq
        %v317 = vshrl.u32 %v316, 7
        %v318 = vsub.s32 0, %v317
        %v319 = vrot.slane %v315, %v318
        %vm320 = vcmask 261120
        %v322 = vsel %vm320, %v308, 0
        %v325 = vsel %vm320, %v311, 0
        %v328 = vsel %vm320, %v312, 0
        %v331 = vsel %vm320, %v313, 0
        %v334 = vsel %vm320, %v314, 0
        %336 = vmatprep.subr.mxu0 0.0
        %337 = vmatpush1.xpose.msra.mxu0 %v325
        %338 = vmatprep.subr.mxu0 0.0
        %339 = vmatpush1.xpose.msra.mxu0 %v328
        %340 = vmatprep.subr.mxu0 0.0
        %341 = vmatpush1.xpose.msra.mxu0 %v331
        %342 = vmatprep.subr.mxu0 0.0
        %343 = vmatpush1.xpose.msra.mxu0 %v334
        %344 = vmatprep.subr.mxu0 0.0
        %345 = vmatpush1.xpose.msra.mxu0 0.0
        %346 = vmatprep.subr.mxu0 0.0
        %347 = vmatpush1.xpose.msra.mxu0 0.0
        %348 = vmatprep.subr.mxu0 0.0
        %349 = vmatpush1.xpose.msra.mxu0 0.0
        %350 = vmatprep.subr.mxu0 0.0
        %351 = vmatpush1.xpose.msra.mxu0 0.0
        %352 = vmatprep.subr.mxu0 0.0
        %353 = vmatpush1.xpose.msra.mxu0 0.0
        %354 = vmatprep.subr.mxu0 0.0
        %355 = vmatpush1.xpose.msra.mxu0 0.0
        %356 = vmatprep.subr.mxu0 0.0
        %357 = vmatpush1.xpose.msra.mxu0 0.0
        %358 = vmatprep.subr.mxu0 0.0
        %359 = vmatpush1.xpose.msra.mxu0 0.0
        %360 = vmatprep.subr.mxu0 0.0
        %361 = vmatpush1.xpose.msra.mxu0 0.0
        %362 = vmatprep.subr.mxu0 0.0
        %363 = vmatpush1.xpose.msra.mxu0 0.0
        %364 = vmatprep.subr.mxu0 0.0
        %365 = vmatpush1.xpose.msra.mxu0 0.0
        %366 = vmatprep.subr.mxu0 0.0
        %367 = vmatpush1.xpose.msra.mxu0 0.0
        %368 = vmatprep.subr.mxu0 0.0
        %369 = vmatpush1.xpose.msra.mxu0 0.0
        %370 = vmatprep.subr.mxu0 0.0
        %371 = vmatpush1.xpose.msra.mxu0 0.0
        %372 = vmatprep.subr.mxu0 0.0
        %373 = vmatpush1.xpose.msra.mxu0 0.0
        %374 = vmatprep.subr.mxu0 0.0
        %375 = vmatpush1.xpose.msra.mxu0 0.0
        %376 = vmatprep.subr.mxu0 0.0
        %377 = vmatpush1.xpose.msra.mxu0 0.0
        %378 = vmatprep.subr.mxu0 0.0
        %379 = vmatpush1.xpose.msra.mxu0 0.0
        %380 = vmatprep.subr.mxu0 0.0
        %381 = vmatpush1.xpose.msra.mxu0 0.0
        %382 = vmatprep.subr.mxu0 0.0
        %383 = vmatpush1.xpose.msra.mxu0 0.0
        %384 = vmatprep.subr.mxu0 0.0
        %385 = vmatpush1.xpose.msra.mxu0 0.0
        %386 = vmatprep.subr.mxu0 0.0
        %387 = vmatpush1.xpose.msra.mxu0 0.0
        %388 = vmatprep.subr.mxu0 0.0
        %389 = vmatpush1.xpose.msra.mxu0 0.0
        %390 = vmatprep.subr.mxu0 0.0
        %391 = vmatpush1.xpose.msra.mxu0 0.0
        %392 = vmatprep.subr.mxu0 0.0
        %393 = vmatpush1.xpose.msra.mxu0 0.0
        %394 = vmatprep.subr.mxu0 0.0
        %395 = vmatpush1.xpose.msra.mxu0 0.0
        %396 = vmatprep.subr.mxu0 0.0
        %397 = vmatpush1.xpose.msra.mxu0 0.0
        %398 = vmatprep.subr.mxu0 0.0
        %399 = vmatpush1.xpose.msra.mxu0 0.0
        %400 = vmatprep.mubr.f32.mxu0 0.0
        %401 = vmatmul.mubr.f32.gmra.mrb[0].mxu0 %v322
        %v402 = vpop.f32.mrb[0].mxu0
        %v403 = vadd.f32 %v319, %v402
        %v404 = vpop.f32.mrb[0].mxu0
        %405 = vdwg.mxu0
        %v406 = vmul.f32 %v403, 0.35355338
        %v407 = vld [vmem:[%s3 + $0x20] sm:$0xff]
        %v408 = vld [vmem:[%s3 + $0x28] sm:$0xff]
        %v409 = vld [vmem:[%s3 + $0x30] sm:$0xff]
        %v410 = vld [vmem:[%s3 + $0x38] sm:$0xff]
        %v411 = vld [vmem:[%s4 + $0x1] sm:$0x1]
        %v412 = vlaneseq
        %v413 = vshrl.u32 %v412, 7
        %v414 = vsub.s32 0, %v413
        %v415 = vrot.slane %v411, %v414
        %v417 = vsel %vm320, %v309, 0
        %v420 = vsel %vm320, %v407, 0
        %v423 = vsel %vm320, %v408, 0
        %v426 = vsel %vm320, %v409, 0
        %v429 = vsel %vm320, %v410, 0
        %431 = vmatprep.subr.mxu0 0.0
        %432 = vmatpush1.xpose.msra.mxu0 %v420
        %433 = vmatprep.subr.mxu0 0.0
        %434 = vmatpush1.xpose.msra.mxu0 %v423
        %435 = vmatprep.subr.mxu0 0.0
        %436 = vmatpush1.xpose.msra.mxu0 %v426
        %437 = vmatprep.subr.mxu0 0.0
        %438 = vmatpush1.xpose.msra.mxu0 %v429
        %439 = vmatprep.subr.mxu0 0.0
        %440 = vmatpush1.xpose.msra.mxu0 0.0
        %441 = vmatprep.subr.mxu0 0.0
        %442 = vmatpush1.xpose.msra.mxu0 0.0
        %443 = vmatprep.subr.mxu0 0.0
        %444 = vmatpush1.xpose.msra.mxu0 0.0
        %445 = vmatprep.subr.mxu0 0.0
        %446 = vmatpush1.xpose.msra.mxu0 0.0
        %447 = vmatprep.subr.mxu0 0.0
        %448 = vmatpush1.xpose.msra.mxu0 0.0
        %449 = vmatprep.subr.mxu0 0.0
        %450 = vmatpush1.xpose.msra.mxu0 0.0
        %451 = vmatprep.subr.mxu0 0.0
        %452 = vmatpush1.xpose.msra.mxu0 0.0
        %453 = vmatprep.subr.mxu0 0.0
        %454 = vmatpush1.xpose.msra.mxu0 0.0
        %455 = vmatprep.subr.mxu0 0.0
        %456 = vmatpush1.xpose.msra.mxu0 0.0
        %457 = vmatprep.subr.mxu0 0.0
        %458 = vmatpush1.xpose.msra.mxu0 0.0
        %459 = vmatprep.subr.mxu0 0.0
        %460 = vmatpush1.xpose.msra.mxu0 0.0
        %461 = vmatprep.subr.mxu0 0.0
        %462 = vmatpush1.xpose.msra.mxu0 0.0
        %463 = vmatprep.subr.mxu0 0.0
        %464 = vmatpush1.xpose.msra.mxu0 0.0
        %465 = vmatprep.subr.mxu0 0.0
        %466 = vmatpush1.xpose.msra.mxu0 0.0
        %467 = vmatprep.subr.mxu0 0.0
        %468 = vmatpush1.xpose.msra.mxu0 0.0
        %469 = vmatprep.subr.mxu0 0.0
        %470 = vmatpush1.xpose.msra.mxu0 0.0
        %471 = vmatprep.subr.mxu0 0.0
        %472 = vmatpush1.xpose.msra.mxu0 0.0
        %473 = vmatprep.subr.mxu0 0.0
        %474 = vmatpush1.xpose.msra.mxu0 0.0
        %475 = vmatprep.subr.mxu0 0.0
        %476 = vmatpush1.xpose.msra.mxu0 0.0
        %477 = vmatprep.subr.mxu0 0.0
        %478 = vmatpush1.xpose.msra.mxu0 0.0
        %479 = vmatprep.subr.mxu0 0.0
        %480 = vmatpush1.xpose.msra.mxu0 0.0
        %481 = vmatprep.subr.mxu0 0.0
        %482 = vmatpush1.xpose.msra.mxu0 0.0
        %483 = vmatprep.subr.mxu0 0.0
        %484 = vmatpush1.xpose.msra.mxu0 0.0
        %485 = vmatprep.subr.mxu0 0.0
        %486 = vmatpush1.xpose.msra.mxu0 0.0
        %487 = vmatprep.subr.mxu0 0.0
        %488 = vmatpush1.xpose.msra.mxu0 0.0
        %489 = vmatprep.subr.mxu0 0.0
        %490 = vmatpush1.xpose.msra.mxu0 0.0
        %491 = vmatprep.subr.mxu0 0.0
        %492 = vmatpush1.xpose.msra.mxu0 0.0
        %493 = vmatprep.subr.mxu0 0.0
        %494 = vmatpush1.xpose.msra.mxu0 0.0
        %495 = vmatprep.mubr.f32.mxu0 0.0
        %496 = vmatmul.mubr.f32.gmra.mrb[0].mxu0 %v417
        %v497 = vpop.f32.mrb[0].mxu0
        %v498 = vadd.f32 %v415, %v497
        %v499 = vpop.f32.mrb[0].mxu0
        %500 = vdwg.mxu0
        %v501 = vld [vmem:[%s3 + $0x40] sm:$0xff]
        %v502 = vld [vmem:[%s3 + $0x48] sm:$0xff]
        %v503 = vld [vmem:[%s3 + $0x50] sm:$0xff]
        %v504 = vld [vmem:[%s3 + $0x58] sm:$0xff]
        %v505 = vld [vmem:[%s4 + $0x2] sm:$0x1]
        %v506 = vlaneseq
        %v507 = vshrl.u32 %v506, 7
        %v508 = vsub.s32 0, %v507
        %v509 = vrot.slane %v505, %v508
        %v511 = vsel %vm320, %v310, 0
        %v514 = vsel %vm320, %v501, 0
        %v517 = vsel %vm320, %v502, 0
        %v520 = vsel %vm320, %v503, 0
        %v523 = vsel %vm320, %v504, 0
        %525 = vmatprep.subr.mxu0 0.0
        %526 = vmatpush1.xpose.msra.mxu0 %v514
        %527 = vmatprep.subr.mxu0 0.0
        %528 = vmatpush1.xpose.msra.mxu0 %v517
        %529 = vmatprep.subr.mxu0 0.0
        %530 = vmatpush1.xpose.msra.mxu0 %v520
        %531 = vmatprep.subr.mxu0 0.0
        %532 = vmatpush1.xpose.msra.mxu0 %v523
        %533 = vmatprep.subr.mxu0 0.0
        %534 = vmatpush1.xpose.msra.mxu0 0.0
        %535 = vmatprep.subr.mxu0 0.0
        %536 = vmatpush1.xpose.msra.mxu0 0.0
        %537 = vmatprep.subr.mxu0 0.0
        %538 = vmatpush1.xpose.msra.mxu0 0.0
        %539 = vmatprep.subr.mxu0 0.0
        %540 = vmatpush1.xpose.msra.mxu0 0.0
        %541 = vmatprep.subr.mxu0 0.0
        %542 = vmatpush1.xpose.msra.mxu0 0.0
        %543 = vmatprep.subr.mxu0 0.0
        %544 = vmatpush1.xpose.msra.mxu0 0.0
        %545 = vmatprep.subr.mxu0 0.0
        %546 = vmatpush1.xpose.msra.mxu0 0.0
        %547 = vmatprep.subr.mxu0 0.0
        %548 = vmatpush1.xpose.msra.mxu0 0.0
        %549 = vmatprep.subr.mxu0 0.0
        %550 = vmatpush1.xpose.msra.mxu0 0.0
        %551 = vmatprep.subr.mxu0 0.0
        %552 = vmatpush1.xpose.msra.mxu0 0.0
        %553 = vmatprep.subr.mxu0 0.0
        %554 = vmatpush1.xpose.msra.mxu0 0.0
        %555 = vmatprep.subr.mxu0 0.0
        %556 = vmatpush1.xpose.msra.mxu0 0.0
        %557 = vmatprep.subr.mxu0 0.0
        %558 = vmatpush1.xpose.msra.mxu0 0.0
        %559 = vmatprep.subr.mxu0 0.0
        %560 = vmatpush1.xpose.msra.mxu0 0.0
        %561 = vmatprep.subr.mxu0 0.0
        %562 = vmatpush1.xpose.msra.mxu0 0.0
        %563 = vmatprep.subr.mxu0 0.0
        %564 = vmatpush1.xpose.msra.mxu0 0.0
        %565 = vmatprep.subr.mxu0 0.0
        %566 = vmatpush1.xpose.msra.mxu0 0.0
        %567 = vmatprep.subr.mxu0 0.0
        %568 = vmatpush1.xpose.msra.mxu0 0.0
        %569 = vmatprep.subr.mxu0 0.0
        %570 = vmatpush1.xpose.msra.mxu0 0.0
        %571 = vmatprep.subr.mxu0 0.0
        %572 = vmatpush1.xpose.msra.mxu0 0.0
        %573 = vmatprep.subr.mxu0 0.0
        %574 = vmatpush1.xpose.msra.mxu0 0.0
        %575 = vmatprep.subr.mxu0 0.0
        %576 = vmatpush1.xpose.msra.mxu0 0.0
        %577 = vmatprep.subr.mxu0 0.0
        %578 = vmatpush1.xpose.msra.mxu0 0.0
        %579 = vmatprep.subr.mxu0 0.0
        %580 = vmatpush1.xpose.msra.mxu0 0.0
        %581 = vmatprep.subr.mxu0 0.0
        %582 = vmatpush1.xpose.msra.mxu0 0.0
        %583 = vmatprep.subr.mxu0 0.0
        %584 = vmatpush1.xpose.msra.mxu0 0.0
        %585 = vmatprep.subr.mxu0 0.0
        %586 = vmatpush1.xpose.msra.mxu0 0.0
        %587 = vmatprep.subr.mxu0 0.0
        %588 = vmatpush1.xpose.msra.mxu0 0.0
        %589 = vmatprep.mubr.f32.mxu0 0.0
        %590 = vmatmul.mubr.f32.gmra.mrb[0].mxu0 %v511
        %v591 = vpop.f32.mrb[0].mxu0
        %v592 = vadd.f32 %v509, %v591
        %v593 = vpop.f32.mrb[0].mxu0
        %594 = vdwg.mxu0
        %vm595 = vcmask 64512
        %v597 = vsel %vm595, %v406, 0
        %v600 = vsel %vm595, %v498, 0
        %602 = vmatprep.subr.mxu0 0.0
        %603 = vmatpush1.xpose.msra.mxu0 %v600
        %604 = vmatprep.subr.mxu0 0.0
        %605 = vmatpush1.xpose.msra.mxu0 0.0
        %606 = vmatprep.subr.mxu0 0.0
        %607 = vmatpush1.xpose.msra.mxu0 0.0
        %608 = vmatprep.subr.mxu0 0.0
        %609 = vmatpush1.xpose.msra.mxu0 0.0
        %610 = vmatprep.subr.mxu0 0.0
        %611 = vmatpush1.xpose.msra.mxu0 0.0
        %612 = vmatprep.subr.mxu0 0.0
        %613 = vmatpush1.xpose.msra.mxu0 0.0
        %614 = vmatprep.subr.mxu0 0.0
        %615 = vmatpush1.xpose.msra.mxu0 0.0
        %616 = vmatprep.subr.mxu0 0.0
        %617 = vmatpush1.xpose.msra.mxu0 0.0
        %618 = vmatprep.subr.mxu0 0.0
        %619 = vmatpush1.xpose.msra.mxu0 0.0
        %620 = vmatprep.subr.mxu0 0.0
        %621 = vmatpush1.xpose.msra.mxu0 0.0
        %622 = vmatprep.subr.mxu0 0.0
        %623 = vmatpush1.xpose.msra.mxu0 0.0
        %624 = vmatprep.subr.mxu0 0.0
        %625 = vmatpush1.xpose.msra.mxu0 0.0
        %626 = vmatprep.subr.mxu0 0.0
        %627 = vmatpush1.xpose.msra.mxu0 0.0
        %628 = vmatprep.subr.mxu0 0.0
        %629 = vmatpush1.xpose.msra.mxu0 0.0
        %630 = vmatprep.subr.mxu0 0.0
        %631 = vmatpush1.xpose.msra.mxu0 0.0
        %632 = vmatprep.subr.mxu0 0.0
        %633 = vmatpush1.xpose.msra.mxu0 0.0
        %634 = vmatprep.subr.mxu0 0.0
        %635 = vmatpush1.xpose.msra.mxu0 0.0
        %636 = vmatprep.subr.mxu0 0.0
        %637 = vmatpush1.xpose.msra.mxu0 0.0
        %638 = vmatprep.subr.mxu0 0.0
        %639 = vmatpush1.xpose.msra.mxu0 0.0
        %640 = vmatprep.subr.mxu0 0.0
        %641 = vmatpush1.xpose.msra.mxu0 0.0
        %642 = vmatprep.subr.mxu0 0.0
        %643 = vmatpush1.xpose.msra.mxu0 0.0
        %644 = vmatprep.subr.mxu0 0.0
        %645 = vmatpush1.xpose.msra.mxu0 0.0
        %646 = vmatprep.subr.mxu0 0.0
        %647 = vmatpush1.xpose.msra.mxu0 0.0
        %648 = vmatprep.subr.mxu0 0.0
        %649 = vmatpush1.xpose.msra.mxu0 0.0
        %650 = vmatprep.subr.mxu0 0.0
        %651 = vmatpush1.xpose.msra.mxu0 0.0
        %652 = vmatprep.subr.mxu0 0.0
        %653 = vmatpush1.xpose.msra.mxu0 0.0
        %654 = vmatprep.subr.mxu0 0.0
        %655 = vmatpush1.xpose.msra.mxu0 0.0
        %656 = vmatprep.subr.mxu0 0.0
        %657 = vmatpush1.xpose.msra.mxu0 0.0
        %658 = vmatprep.subr.mxu0 0.0
        %659 = vmatpush1.xpose.msra.mxu0 0.0
        %660 = vmatprep.subr.mxu0 0.0
        %661 = vmatpush1.xpose.msra.mxu0 0.0
        %662 = vmatprep.subr.mxu0 0.0
        %663 = vmatpush1.xpose.msra.mxu0 0.0
        %664 = vmatprep.subr.mxu0 0.0
        %665 = vmatpush1.xpose.msra.mxu0 0.0
        %666 = vmatprep.mubr.f32.mxu0 0.0
        %667 = vmatmul.mubr.f32.gmra.mrb[0].mxu0 %v597
        %v668 = vpop.f32.mrb[0].mxu0
        %v669 = vadd.f32 0.0, %v668
        %v670 = vpop.f32.mrb[0].mxu0
        %671 = vdwg.mxu0
        %v672 = vsel %vm595, %v669, -inf
        %673 = vmax.xlane.f32.xlu0 %v672
        %v674 = vpop.xlane.xlu0 %673
        %v675 = vsub.f32 %v669, %v674
        %v676 = vmul.f32 %v675, 1.442695
        %v677 = vpow.pop %v676
        %v678 = vsel %vm595, %v677, 0.0
        %679 = vadd.xlane.f32.xlu0 %v678
        %v680 = vpop.xlane.xlu0 %679
        %v681 = vrcp.pop %v680
        %v682 = vmul.f32 1.0, %v681
        %v683 = vmul.f32 %v677, %v682
        %v685 = vsel %vm595, %v683, 0
        %687 = vmatprep.subr.mxu0 0.0
        %688 = vmatpush1.msra.mxu0 %v592
        %689 = vmatprep.subr.mxu0 0.0
        %690 = vmatpush1.msra.mxu0 0.0
        %691 = vmatprep.subr.mxu0 0.0
        %692 = vmatpush1.msra.mxu0 0.0
        %693 = vmatprep.subr.mxu0 0.0
        %694 = vmatpush1.msra.mxu0 0.0
        %695 = vmatprep.subr.mxu0 0.0
        %696 = vmatpush1.msra.mxu0 0.0
        %697 = vmatprep.subr.mxu0 0.0
        %698 = vmatpush1.msra.mxu0 0.0
        %699 = vmatprep.subr.mxu0 0.0
        %700 = vmatpush1.msra.mxu0 0.0
        %701 = vmatprep.subr.mxu0 0.0
        %702 = vmatpush1.msra.mxu0 0.0
        %703 = vmatprep.subr.mxu0 0.0
        %704 = vmatpush1.msra.mxu0 0.0
        %705 = vmatprep.subr.mxu0 0.0
        %706 = vmatpush1.msra.mxu0 0.0
        %707 = vmatprep.subr.mxu0 0.0
        %708 = vmatpush1.msra.mxu0 0.0
        %709 = vmatprep.subr.mxu0 0.0
        %710 = vmatpush1.msra.mxu0 0.0
        %711 = vmatprep.subr.mxu0 0.0
        %712 = vmatpush1.msra.mxu0 0.0
        %713 = vmatprep.subr.mxu0 0.0
        %714 = vmatpush1.msra.mxu0 0.0
        %715 = vmatprep.subr.mxu0 0.0
        %716 = vmatpush1.msra.mxu0 0.0
        %717 = vmatprep.subr.mxu0 0.0
        %718 = vmatpush1.msra.mxu0 0.0
        %719 = vmatprep.subr.mxu0 0.0
        %720 = vmatpush1.msra.mxu0 0.0
        %721 = vmatprep.subr.mxu0 0.0
        %722 = vmatpush1.msra.mxu0 0.0
        %723 = vmatprep.subr.mxu0 0.0
        %724 = vmatpush1.msra.mxu0 0.0
        %725 = vmatprep.subr.mxu0 0.0
        %726 = vmatpush1.msra.mxu0 0.0
        %727 = vmatprep.subr.mxu0 0.0
        %728 = vmatpush1.msra.mxu0 0.0
        %729 = vmatprep.subr.mxu0 0.0
        %730 = vmatpush1.msra.mxu0 0.0
        %731 = vmatprep.subr.mxu0 0.0
        %732 = vmatpush1.msra.mxu0 0.0
        %733 = vmatprep.subr.mxu0 0.0
        %734 = vmatpush1.msra.mxu0 0.0
        %735 = vmatprep.subr.mxu0 0.0
        %736 = vmatpush1.msra.mxu0 0.0
        %737 = vmatprep.subr.mxu0 0.0
        %738 = vmatpush1.msra.mxu0 0.0
        %739 = vmatprep.subr.mxu0 0.0
        %740 = vmatpush1.msra.mxu0 0.0
        %741 = vmatprep.subr.mxu0 0.0
        %742 = vmatpush1.msra.mxu0 0.0
        %743 = vmatprep.subr.mxu0 0.0
        %744 = vmatpush1.msra.mxu0 0.0
        %745 = vmatprep.subr.mxu0 0.0
        %746 = vmatpush1.msra.mxu0 0.0
        %747 = vmatprep.subr.mxu0 0.0
        %748 = vmatpush1.msra.mxu0 0.0
        %749 = vmatprep.subr.mxu0 0.0
        %750 = vmatpush1.msra.mxu0 0.0
        %751 = vmatprep.mubr.f32.mxu0 0.0
        %752 = vmatmul.mubr.f32.gmra.mrb[0].mxu0 %v685
        %v753 = vpop.f32.mrb[0].mxu0
        %v754 = vadd.f32 0.0, %v753
        %v755 = vpop.f32.mrb[0].mxu0
        %756 = vdwg.mxu0
        %757 = vrot.lane.b32.xlu0 %v406, 120
        %v758 = vpop.permute.xlu0 %757
        %759 = vrot.lane.b32.xlu0 %v498, 120
        %v760 = vpop.permute.xlu0 %759
        %v761 = vsel %vm595, %v758, 0
        %v763 = vsel %vm595, %v760, 0
        %765 = vmatprep.subr.mxu0 0.0
        %766 = vmatpush1.xpose.msra.mxu0 %v763
        %767 = vmatprep.subr.mxu0 0.0
        %768 = vmatpush1.xpose.msra.mxu0 0.0
        %769 = vmatprep.subr.mxu0 0.0
        %770 = vmatpush1.xpose.msra.mxu0 0.0
        %771 = vmatprep.subr.mxu0 0.0
        %772 = vmatpush1.xpose.msra.mxu0 0.0
        %773 = vmatprep.subr.mxu0 0.0
        %774 = vmatpush1.xpose.msra.mxu0 0.0
        %775 = vmatprep.subr.mxu0 0.0
        %776 = vmatpush1.xpose.msra.mxu0 0.0
        %777 = vmatprep.subr.mxu0 0.0
        %778 = vmatpush1.xpose.msra.mxu0 0.0
        %779 = vmatprep.subr.mxu0 0.0
        %780 = vmatpush1.xpose.msra.mxu0 0.0
        %781 = vmatprep.subr.mxu0 0.0
        %782 = vmatpush1.xpose.msra.mxu0 0.0
        %783 = vmatprep.subr.mxu0 0.0
        %784 = vmatpush1.xpose.msra.mxu0 0.0
        %785 = vmatprep.subr.mxu0 0.0
        %786 = vmatpush1.xpose.msra.mxu0 0.0
        %787 = vmatprep.subr.mxu0 0.0
        %788 = vmatpush1.xpose.msra.mxu0 0.0
        %789 = vmatprep.subr.mxu0 0.0
        %790 = vmatpush1.xpose.msra.mxu0 0.0
        %791 = vmatprep.subr.mxu0 0.0
        %792 = vmatpush1.xpose.msra.mxu0 0.0
        %793 = vmatprep.subr.mxu0 0.0
        %794 = vmatpush1.xpose.msra.mxu0 0.0
        %795 = vmatprep.subr.mxu0 0.0
        %796 = vmatpush1.xpose.msra.mxu0 0.0
        %797 = vmatprep.subr.mxu0 0.0
        %798 = vmatpush1.xpose.msra.mxu0 0.0
        %799 = vmatprep.subr.mxu0 0.0
        %800 = vmatpush1.xpose.msra.mxu0 0.0
        %801 = vmatprep.subr.mxu0 0.0
        %802 = vmatpush1.xpose.msra.mxu0 0.0
        %803 = vmatprep.subr.mxu0 0.0
        %804 = vmatpush1.xpose.msra.mxu0 0.0
        %805 = vmatprep.subr.mxu0 0.0
        %806 = vmatpush1.xpose.msra.mxu0 0.0
        %807 = vmatprep.subr.mxu0 0.0
        %808 = vmatpush1.xpose.msra.mxu0 0.0
        %809 = vmatprep.subr.mxu0 0.0
        %810 = vmatpush1.xpose.msra.mxu0 0.0
        %811 = vmatprep.subr.mxu0 0.0
        %812 = vmatpush1.xpose.msra.mxu0 0.0
        %813 = vmatprep.subr.mxu0 0.0
        %814 = vmatpush1.xpose.msra.mxu0 0.0
        %815 = vmatprep.subr.mxu0 0.0
        %816 = vmatpush1.xpose.msra.mxu0 0.0
        %817 = vmatprep.subr.mxu0 0.0
        %818 = vmatpush1.xpose.msra.mxu0 0.0
        %819 = vmatprep.subr.mxu0 0.0
        %820 = vmatpush1.xpose.msra.mxu0 0.0
        %821 = vmatprep.subr.mxu0 0.0
        %822 = vmatpush1.xpose.msra.mxu0 0.0
        %823 = vmatprep.subr.mxu0 0.0
        %824 = vmatpush1.xpose.msra.mxu0 0.0
        %825 = vmatprep.subr.mxu0 0.0
        %826 = vmatpush1.xpose.msra.mxu0 0.0
        %827 = vmatprep.subr.mxu0 0.0
        %828 = vmatpush1.xpose.msra.mxu0 0.0
        %829 = vmatprep.mubr.f32.mxu0 0.0
        %830 = vmatmul.mubr.f32.gmra.mrb[0].mxu0 %v761
        %v831 = vpop.f32.mrb[0].mxu0
        %v832 = vadd.f32 0.0, %v831
        %v833 = vpop.f32.mrb[0].mxu0
        %834 = vdwg.mxu0
        %v835 = vsel %vm595, %v832, -inf
        %836 = vmax.xlane.f32.xlu0 %v835
        %v837 = vpop.xlane.xlu0 %836
        %v838 = vsub.f32 %v832, %v837
        %v839 = vmul.f32 %v838, 1.442695
        %v840 = vpow.pop %v839
        %v841 = vsel %vm595, %v840, 0.0
        %842 = vadd.xlane.f32.xlu0 %v841
        %v843 = vpop.xlane.xlu0 %842
        %v844 = vrcp.pop %v843
        %v845 = vmul.f32 1.0, %v844
        %v846 = vmul.f32 %v840, %v845
        %848 = vrot.lane.b32.xlu0 %v592, 120
        %v849 = vpop.permute.xlu0 %848
        %v852 = vsel %vm595, %v846, 0
        %854 = vmatprep.subr.mxu0 0.0
        %855 = vmatpush1.msra.mxu0 %v849
        %856 = vmatprep.subr.mxu0 0.0
        %857 = vmatpush1.msra.mxu0 0.0
        %858 = vmatprep.subr.mxu0 0.0
        %859 = vmatpush1.msra.mxu0 0.0
        %860 = vmatprep.subr.mxu0 0.0
        %861 = vmatpush1.msra.mxu0 0.0
        %862 = vmatprep.subr.mxu0 0.0
        %863 = vmatpush1.msra.mxu0 0.0
        %864 = vmatprep.subr.mxu0 0.0
        %865 = vmatpush1.msra.mxu0 0.0
        %866 = vmatprep.subr.mxu0 0.0
        %867 = vmatpush1.msra.mxu0 0.0
        %868 = vmatprep.subr.mxu0 0.0
        %869 = vmatpush1.msra.mxu0 0.0
        %870 = vmatprep.subr.mxu0 0.0
        %871 = vmatpush1.msra.mxu0 0.0
        %872 = vmatprep.subr.mxu0 0.0
        %873 = vmatpush1.msra.mxu0 0.0
        %874 = vmatprep.subr.mxu0 0.0
        %875 = vmatpush1.msra.mxu0 0.0
        %876 = vmatprep.subr.mxu0 0.0
        %877 = vmatpush1.msra.mxu0 0.0
        %878 = vmatprep.subr.mxu0 0.0
        %879 = vmatpush1.msra.mxu0 0.0
        %880 = vmatprep.subr.mxu0 0.0
        %881 = vmatpush1.msra.mxu0 0.0
        %882 = vmatprep.subr.mxu0 0.0
        %883 = vmatpush1.msra.mxu0 0.0
        %884 = vmatprep.subr.mxu0 0.0
        %885 = vmatpush1.msra.mxu0 0.0
        %886 = vmatprep.subr.mxu0 0.0
        %887 = vmatpush1.msra.mxu0 0.0
        %888 = vmatprep.subr.mxu0 0.0
        %889 = vmatpush1.msra.mxu0 0.0
        %890 = vmatprep.subr.mxu0 0.0
        %891 = vmatpush1.msra.mxu0 0.0
        %892 = vmatprep.subr.mxu0 0.0
        %893 = vmatpush1.msra.mxu0 0.0
        %894 = vmatprep.subr.mxu0 0.0
        %895 = vmatpush1.msra.mxu0 0.0
        %896 = vmatprep.subr.mxu0 0.0
        %897 = vmatpush1.msra.mxu0 0.0
        %898 = vmatprep.subr.mxu0 0.0
        %899 = vmatpush1.msra.mxu0 0.0
        %900 = vmatprep.subr.mxu0 0.0
        %901 = vmatpush1.msra.mxu0 0.0
        %902 = vmatprep.subr.mxu0 0.0
        %903 = vmatpush1.msra.mxu0 0.0
        %904 = vmatprep.subr.mxu0 0.0
        %905 = vmatpush1.msra.mxu0 0.0
        %906 = vmatprep.subr.mxu0 0.0
        %907 = vmatpush1.msra.mxu0 0.0
        %908 = vmatprep.subr.mxu0 0.0
        %909 = vmatpush1.msra.mxu0 0.0
        %910 = vmatprep.subr.mxu0 0.0
        %911 = vmatpush1.msra.mxu0 0.0
        %912 = vmatprep.subr.mxu0 0.0
        %913 = vmatpush1.msra.mxu0 0.0
        %914 = vmatprep.subr.mxu0 0.0
        %915 = vmatpush1.msra.mxu0 0.0
        %916 = vmatprep.subr.mxu0 0.0
        %917 = vmatpush1.msra.mxu0 0.0
        %918 = vmatprep.mubr.f32.mxu0 0.0
        %919 = vmatmul.mubr.f32.gmra.mrb[0].mxu0 %v852
        %v920 = vpop.f32.mrb[0].mxu0
        %v921 = vadd.f32 0.0, %v920
        %v922 = vpop.f32.mrb[0].mxu0
        %923 = vdwg.mxu0
        %924 = vrot.lane.b32.xlu0 %v406, 112
        %v925 = vpop.permute.xlu0 %924
        %926 = vrot.lane.b32.xlu0 %v498, 112
        %v927 = vpop.permute.xlu0 %926
        %v928 = vsel %vm595, %v925, 0
        %v930 = vsel %vm595, %v927, 0
        %932 = vmatprep.subr.mxu0 0.0
        %933 = vmatpush1.xpose.msra.mxu0 %v930
        %934 = vmatprep.subr.mxu0 0.0
        %935 = vmatpush1.xpose.msra.mxu0 0.0
        %936 = vmatprep.subr.mxu0 0.0
        %937 = vmatpush1.xpose.msra.mxu0 0.0
        %938 = vmatprep.subr.mxu0 0.0
        %939 = vmatpush1.xpose.msra.mxu0 0.0
        %940 = vmatprep.subr.mxu0 0.0
        %941 = vmatpush1.xpose.msra.mxu0 0.0
        %942 = vmatprep.subr.mxu0 0.0
        %943 = vmatpush1.xpose.msra.mxu0 0.0
        %944 = vmatprep.subr.mxu0 0.0
        %945 = vmatpush1.xpose.msra.mxu0 0.0
        %946 = vmatprep.subr.mxu0 0.0
        %947 = vmatpush1.xpose.msra.mxu0 0.0
        %948 = vmatprep.subr.mxu0 0.0
        %949 = vmatpush1.xpose.msra.mxu0 0.0
        %950 = vmatprep.subr.mxu0 0.0
        %951 = vmatpush1.xpose.msra.mxu0 0.0
        %952 = vmatprep.subr.mxu0 0.0
        %953 = vmatpush1.xpose.msra.mxu0 0.0
        %954 = vmatprep.subr.mxu0 0.0
        %955 = vmatpush1.xpose.msra.mxu0 0.0
        %956 = vmatprep.subr.mxu0 0.0
        %957 = vmatpush1.xpose.msra.mxu0 0.0
        %958 = vmatprep.subr.mxu0 0.0
        %959 = vmatpush1.xpose.msra.mxu0 0.0
        %960 = vmatprep.subr.mxu0 0.0
        %961 = vmatpush1.xpose.msra.mxu0 0.0
        %962 = vmatprep.subr.mxu0 0.0
        %963 = vmatpush1.xpose.msra.mxu0 0.0
        %964 = vmatprep.subr.mxu0 0.0
        %965 = vmatpush1.xpose.msra.mxu0 0.0
        %966 = vmatprep.subr.mxu0 0.0
        %967 = vmatpush1.xpose.msra.mxu0 0.0
        %968 = vmatprep.subr.mxu0 0.0
        %969 = vmatpush1.xpose.msra.mxu0 0.0
        %970 = vmatprep.subr.mxu0 0.0
        %971 = vmatpush1.xpose.msra.mxu0 0.0
        %972 = vmatprep.subr.mxu0 0.0
        %973 = vmatpush1.xpose.msra.mxu0 0.0
        %974 = vmatprep.subr.mxu0 0.0
        %975 = vmatpush1.xpose.msra.mxu0 0.0
        %976 = vmatprep.subr.mxu0 0.0
        %977 = vmatpush1.xpose.msra.mxu0 0.0
        %978 = vmatprep.subr.mxu0 0.0
        %979 = vmatpush1.xpose.msra.mxu0 0.0
        %980 = vmatprep.subr.mxu0 0.0
        %981 = vmatpush1.xpose.msra.mxu0 0.0
        %982 = vmatprep.subr.mxu0 0.0
        %983 = vmatpush1.xpose.msra.mxu0 0.0
        %984 = vmatprep.subr.mxu0 0.0
        %985 = vmatpush1.xpose.msra.mxu0 0.0
        %986 = vmatprep.subr.mxu0 0.0
        %987 = vmatpush1.xpose.msra.mxu0 0.0
        %988 = vmatprep.subr.mxu0 0.0
        %989 = vmatpush1.xpose.msra.mxu0 0.0
        %990 = vmatprep.subr.mxu0 0.0
        %991 = vmatpush1.xpose.msra.mxu0 0.0
        %992 = vmatprep.subr.mxu0 0.0
        %993 = vmatpush1.xpose.msra.mxu0 0.0
        %994 = vmatprep.subr.mxu0 0.0
        %995 = vmatpush1.xpose.msra.mxu0 0.0
        %996 = vmatprep.mubr.f32.mxu0 0.0
        %997 = vmatmul.mubr.f32.gmra.mrb[0].mxu0 %v928
        %v998 = vpop.f32.mrb[0].mxu0
        %v999 = vadd.f32 0.0, %v998
        %v1000 = vpop.f32.mrb[0].mxu0
        %1001 = vdwg.mxu0
        %v1002 = vsel %vm595, %v999, -inf
        %1003 = vmax.xlane.f32.xlu0 %v1002
        %v1004 = vpop.xlane.xlu0 %1003
        %v1005 = vsub.f32 %v999, %v1004
        %v1006 = vmul.f32 %v1005, 1.442695
        %v1007 = vpow.pop %v1006
        %v1008 = vsel %vm595, %v1007, 0.0
        %1009 = vadd.xlane.f32.xlu0 %v1008
        %v1010 = vpop.xlane.xlu0 %1009
        %v1011 = vrcp.pop %v1010
        %v1012 = vmul.f32 1.0, %v1011
        %v1013 = vmul.f32 %v1007, %v1012
        %1014 = vrot.lane.b32.xlu0 %v592, 112
        %v1015 = vpop.permute.xlu0 %1014
        %v1018 = vsel %vm595, %v1013, 0
        %1020 = vmatprep.subr.mxu0 0.0
        %1021 = vmatpush1.msra.mxu0 %v1015
        %1022 = vmatprep.subr.mxu0 0.0
        %1023 = vmatpush1.msra.mxu0 0.0
        %1024 = vmatprep.subr.mxu0 0.0
        %1025 = vmatpush1.msra.mxu0 0.0
        %1026 = vmatprep.subr.mxu0 0.0
        %1027 = vmatpush1.msra.mxu0 0.0
        %1028 = vmatprep.subr.mxu0 0.0
        %1029 = vmatpush1.msra.mxu0 0.0
        %1030 = vmatprep.subr.mxu0 0.0
        %1031 = vmatpush1.msra.mxu0 0.0
        %1032 = vmatprep.subr.mxu0 0.0
        %1033 = vmatpush1.msra.mxu0 0.0
        %1034 = vmatprep.subr.mxu0 0.0
        %1035 = vmatpush1.msra.mxu0 0.0
        %1036 = vmatprep.subr.mxu0 0.0
        %1037 = vmatpush1.msra.mxu0 0.0
        %1038 = vmatprep.subr.mxu0 0.0
        %1039 = vmatpush1.msra.mxu0 0.0
        %1040 = vmatprep.subr.mxu0 0.0
        %1041 = vmatpush1.msra.mxu0 0.0
        %1042 = vmatprep.subr.mxu0 0.0
        %1043 = vmatpush1.msra.mxu0 0.0
        %1044 = vmatprep.subr.mxu0 0.0
        %1045 = vmatpush1.msra.mxu0 0.0
        %1046 = vmatprep.subr.mxu0 0.0
        %1047 = vmatpush1.msra.mxu0 0.0
        %1048 = vmatprep.subr.mxu0 0.0
        %1049 = vmatpush1.msra.mxu0 0.0
        %1050 = vmatprep.subr.mxu0 0.0
        %1051 = vmatpush1.msra.mxu0 0.0
        %1052 = vmatprep.subr.mxu0 0.0
        %1053 = vmatpush1.msra.mxu0 0.0
        %1054 = vmatprep.subr.mxu0 0.0
        %1055 = vmatpush1.msra.mxu0 0.0
        %1056 = vmatprep.subr.mxu0 0.0
        %1057 = vmatpush1.msra.mxu0 0.0
        %1058 = vmatprep.subr.mxu0 0.0
        %1059 = vmatpush1.msra.mxu0 0.0
        %1060 = vmatprep.subr.mxu0 0.0
        %1061 = vmatpush1.msra.mxu0 0.0
        %1062 = vmatprep.subr.mxu0 0.0
        %1063 = vmatpush1.msra.mxu0 0.0
        %1064 = vmatprep.subr.mxu0 0.0
        %1065 = vmatpush1.msra.mxu0 0.0
        %1066 = vmatprep.subr.mxu0 0.0
        %1067 = vmatpush1.msra.mxu0 0.0
        %1068 = vmatprep.subr.mxu0 0.0
        %1069 = vmatpush1.msra.mxu0 0.0
        %1070 = vmatprep.subr.mxu0 0.0
        %1071 = vmatpush1.msra.mxu0 0.0
        %1072 = vmatprep.subr.mxu0 0.0
        %1073 = vmatpush1.msra.mxu0 0.0
        %1074 = vmatprep.subr.mxu0 0.0
        %1075 = vmatpush1.msra.mxu0 0.0
        %1076 = vmatprep.subr.mxu0 0.0
        %1077 = vmatpush1.msra.mxu0 0.0
        %1078 = vmatprep.subr.mxu0 0.0
        %1079 = vmatpush1.msra.mxu0 0.0
        %1080 = vmatprep.subr.mxu0 0.0
        %1081 = vmatpush1.msra.mxu0 0.0
        %1082 = vmatprep.subr.mxu0 0.0
        %1083 = vmatpush1.msra.mxu0 0.0
        %1084 = vmatprep.mubr.f32.mxu0 0.0
        %1085 = vmatmul.mubr.f32.gmra.mrb[0].mxu0 %v1018
        %v1086 = vpop.f32.mrb[0].mxu0
        %v1087 = vadd.f32 0.0, %v1086
        %v1088 = vpop.f32.mrb[0].mxu0
        %1089 = vdwg.mxu0
        %1090 = vrot.lane.b32.xlu0 %v406, 104
        %v1091 = vpop.permute.xlu0 %1090
        %1092 = vrot.lane.b32.xlu0 %v498, 104
        %v1093 = vpop.permute.xlu0 %1092
        %v1094 = vsel %vm595, %v1091, 0
        %v1096 = vsel %vm595, %v1093, 0
        %1098 = vmatprep.subr.mxu0 0.0
        %1099 = vmatpush1.xpose.msra.mxu0 %v1096
        %1100 = vmatprep.subr.mxu0 0.0
        %1101 = vmatpush1.xpose.msra.mxu0 0.0
        %1102 = vmatprep.subr.mxu0 0.0
        %1103 = vmatpush1.xpose.msra.mxu0 0.0
        %1104 = vmatprep.subr.mxu0 0.0
        %1105 = vmatpush1.xpose.msra.mxu0 0.0
        %1106 = vmatprep.subr.mxu0 0.0
        %1107 = vmatpush1.xpose.msra.mxu0 0.0
        %1108 = vmatprep.subr.mxu0 0.0
        %1109 = vmatpush1.xpose.msra.mxu0 0.0
        %1110 = vmatprep.subr.mxu0 0.0
        %1111 = vmatpush1.xpose.msra.mxu0 0.0
        %1112 = vmatprep.subr.mxu0 0.0
        %1113 = vmatpush1.xpose.msra.mxu0 0.0
        %1114 = vmatprep.subr.mxu0 0.0
        %1115 = vmatpush1.xpose.msra.mxu0 0.0
        %1116 = vmatprep.subr.mxu0 0.0
        %1117 = vmatpush1.xpose.msra.mxu0 0.0
        %1118 = vmatprep.subr.mxu0 0.0
        %1119 = vmatpush1.xpose.msra.mxu0 0.0
        %1120 = vmatprep.subr.mxu0 0.0
        %1121 = vmatpush1.xpose.msra.mxu0 0.0
        %1122 = vmatprep.subr.mxu0 0.0
        %1123 = vmatpush1.xpose.msra.mxu0 0.0
        %1124 = vmatprep.subr.mxu0 0.0
        %1125 = vmatpush1.xpose.msra.mxu0 0.0
        %1126 = vmatprep.subr.mxu0 0.0
        %1127 = vmatpush1.xpose.msra.mxu0 0.0
        %1128 = vmatprep.subr.mxu0 0.0
        %1129 = vmatpush1.xpose.msra.mxu0 0.0
        %1130 = vmatprep.subr.mxu0 0.0
        %1131 = vmatpush1.xpose.msra.mxu0 0.0
        %1132 = vmatprep.subr.mxu0 0.0
        %1133 = vmatpush1.xpose.msra.mxu0 0.0
        %1134 = vmatprep.subr.mxu0 0.0
        %1135 = vmatpush1.xpose.msra.mxu0 0.0
        %1136 = vmatprep.subr.mxu0 0.0
        %1137 = vmatpush1.xpose.msra.mxu0 0.0
        %1138 = vmatprep.subr.mxu0 0.0
        %1139 = vmatpush1.xpose.msra.mxu0 0.0
        %1140 = vmatprep.subr.mxu0 0.0
        %1141 = vmatpush1.xpose.msra.mxu0 0.0
        %1142 = vmatprep.subr.mxu0 0.0
        %1143 = vmatpush1.xpose.msra.mxu0 0.0
        %1144 = vmatprep.subr.mxu0 0.0
        %1145 = vmatpush1.xpose.msra.mxu0 0.0
        %1146 = vmatprep.subr.mxu0 0.0
        %1147 = vmatpush1.xpose.msra.mxu0 0.0
        %1148 = vmatprep.subr.mxu0 0.0
        %1149 = vmatpush1.xpose.msra.mxu0 0.0
        %1150 = vmatprep.subr.mxu0 0.0
        %1151 = vmatpush1.xpose.msra.mxu0 0.0
        %1152 = vmatprep.subr.mxu0 0.0
        %1153 = vmatpush1.xpose.msra.mxu0 0.0
        %1154 = vmatprep.subr.mxu0 0.0
        %1155 = vmatpush1.xpose.msra.mxu0 0.0
        %1156 = vmatprep.subr.mxu0 0.0
        %1157 = vmatpush1.xpose.msra.mxu0 0.0
        %1158 = vmatprep.subr.mxu0 0.0
        %1159 = vmatpush1.xpose.msra.mxu0 0.0
        %1160 = vmatprep.subr.mxu0 0.0
        %1161 = vmatpush1.xpose.msra.mxu0 0.0
        %1162 = vmatprep.mubr.f32.mxu0 0.0
        %1163 = vmatmul.mubr.f32.gmra.mrb[0].mxu0 %v1094
        %v1164 = vpop.f32.mrb[0].mxu0
        %v1165 = vadd.f32 0.0, %v1164
        %v1166 = vpop.f32.mrb[0].mxu0
        %1167 = vdwg.mxu0
        %v1168 = vsel %vm595, %v1165, -inf
        %1169 = vmax.xlane.f32.xlu0 %v1168
        %v1170 = vpop.xlane.xlu0 %1169
        %v1171 = vsub.f32 %v1165, %v1170
        %v1172 = vmul.f32 %v1171, 1.442695
        %v1173 = vpow.pop %v1172
        %v1174 = vsel %vm595, %v1173, 0.0
        %1175 = vadd.xlane.f32.xlu0 %v1174
        %v1176 = vpop.xlane.xlu0 %1175
        %v1177 = vrcp.pop %v1176
        %v1178 = vmul.f32 1.0, %v1177
        %v1179 = vmul.f32 %v1173, %v1178
        %1180 = vrot.lane.b32.xlu0 %v592, 104
        %v1181 = vpop.permute.xlu0 %1180
        %v1184 = vsel %vm595, %v1179, 0
        %1186 = vmatprep.subr.mxu0 0.0
        %1187 = vmatpush1.msra.mxu0 %v1181
        %1188 = vmatprep.subr.mxu0 0.0
        %1189 = vmatpush1.msra.mxu0 0.0
        %1190 = vmatprep.subr.mxu0 0.0
        %1191 = vmatpush1.msra.mxu0 0.0
        %1192 = vmatprep.subr.mxu0 0.0
        %1193 = vmatpush1.msra.mxu0 0.0
        %1194 = vmatprep.subr.mxu0 0.0
        %1195 = vmatpush1.msra.mxu0 0.0
        %1196 = vmatprep.subr.mxu0 0.0
        %1197 = vmatpush1.msra.mxu0 0.0
        %1198 = vmatprep.subr.mxu0 0.0
        %1199 = vmatpush1.msra.mxu0 0.0
        %1200 = vmatprep.subr.mxu0 0.0
        %1201 = vmatpush1.msra.mxu0 0.0
        %1202 = vmatprep.subr.mxu0 0.0
        %1203 = vmatpush1.msra.mxu0 0.0
        %1204 = vmatprep.subr.mxu0 0.0
        %1205 = vmatpush1.msra.mxu0 0.0
        %1206 = vmatprep.subr.mxu0 0.0
        %1207 = vmatpush1.msra.mxu0 0.0
        %1208 = vmatprep.subr.mxu0 0.0
        %1209 = vmatpush1.msra.mxu0 0.0
        %1210 = vmatprep.subr.mxu0 0.0
        %1211 = vmatpush1.msra.mxu0 0.0
        %1212 = vmatprep.subr.mxu0 0.0
        %1213 = vmatpush1.msra.mxu0 0.0
        %1214 = vmatprep.subr.mxu0 0.0
        %1215 = vmatpush1.msra.mxu0 0.0
        %1216 = vmatprep.subr.mxu0 0.0
        %1217 = vmatpush1.msra.mxu0 0.0
        %1218 = vmatprep.subr.mxu0 0.0
        %1219 = vmatpush1.msra.mxu0 0.0
        %1220 = vmatprep.subr.mxu0 0.0
        %1221 = vmatpush1.msra.mxu0 0.0
        %1222 = vmatprep.subr.mxu0 0.0
        %1223 = vmatpush1.msra.mxu0 0.0
        %1224 = vmatprep.subr.mxu0 0.0
        %1225 = vmatpush1.msra.mxu0 0.0
        %1226 = vmatprep.subr.mxu0 0.0
        %1227 = vmatpush1.msra.mxu0 0.0
        %1228 = vmatprep.subr.mxu0 0.0
        %1229 = vmatpush1.msra.mxu0 0.0
        %1230 = vmatprep.subr.mxu0 0.0
        %1231 = vmatpush1.msra.mxu0 0.0
        %1232 = vmatprep.subr.mxu0 0.0
        %1233 = vmatpush1.msra.mxu0 0.0
        %1234 = vmatprep.subr.mxu0 0.0
        %1235 = vmatpush1.msra.mxu0 0.0
        %1236 = vmatprep.subr.mxu0 0.0
        %1237 = vmatpush1.msra.mxu0 0.0
        %1238 = vmatprep.subr.mxu0 0.0
        %1239 = vmatpush1.msra.mxu0 0.0
        %1240 = vmatprep.subr.mxu0 0.0
        %1241 = vmatpush1.msra.mxu0 0.0
        %1242 = vmatprep.subr.mxu0 0.0
        %1243 = vmatpush1.msra.mxu0 0.0
        %1244 = vmatprep.subr.mxu0 0.0
        %1245 = vmatpush1.msra.mxu0 0.0
        %1246 = vmatprep.subr.mxu0 0.0
        %1247 = vmatpush1.msra.mxu0 0.0
        %1248 = vmatprep.subr.mxu0 0.0
        %1249 = vmatpush1.msra.mxu0 0.0
        %1250 = vmatprep.mubr.f32.mxu0 0.0
        %1251 = vmatmul.mubr.f32.gmra.mrb[0].mxu0 %v1184
        %v1252 = vpop.f32.mrb[0].mxu0
        %v1253 = vadd.f32 0.0, %v1252
        %v1254 = vpop.f32.mrb[0].mxu0
        %1255 = vdwg.mxu0
        %1257 = vrot.lane.b32.xlu0 %v921, 8
        %v1258 = vpop.permute.xlu0 %1257
        %1261 = vrot.lane.b32.xlu0 %v1087, 16
        %v1262 = vpop.permute.xlu0 %1261
        %1265 = vrot.lane.b32.xlu0 %v1253, 24
        %v1266 = vpop.permute.xlu0 %1265
        %v1268 = vsel %vm595, %v754, %v1258
        %vm1269 = vcmask 130048
        %v1270 = vsel %vm1269, %v1268, %v1262
        %vm1271 = vcmask 195584
        %v1272 = vsel %vm1271, %v1270, %v1266
        %v1273 = vld [vmem:[%s5] sm:$0xff]
        %v1274 = vld [vmem:[%s5 + $0x8] sm:$0xff]
        %v1275 = vld [vmem:[%s5 + $0x10] sm:$0xff]
        %v1276 = vld [vmem:[%s5 + $0x18] sm:$0xff]
        %v1277 = vld [vmem:[%s6] sm:$0x1]
        %v1279 = vlaneseq
        %v1280 = vshrl.u32 %v1279, 7
        %v1281 = vsub.s32 0, %v1280
        %v1282 = vrot.slane %v1277, %v1281
        %v1285 = vsel %vm320, %v1272, 0
        %v1288 = vsel %vm320, %v1273, 0
        %v1291 = vsel %vm320, %v1274, 0
        %v1294 = vsel %vm320, %v1275, 0
        %v1297 = vsel %vm320, %v1276, 0
        %1299 = vmatprep.subr.mxu0 0.0
        %1300 = vmatpush1.xpose.msra.mxu0 %v1288
        %1301 = vmatprep.subr.mxu0 0.0
        %1302 = vmatpush1.xpose.msra.mxu0 %v1291
        %1303 = vmatprep.subr.mxu0 0.0
        %1304 = vmatpush1.xpose.msra.mxu0 %v1294
        %1305 = vmatprep.subr.mxu0 0.0
        %1306 = vmatpush1.xpose.msra.mxu0 %v1297
        %1307 = vmatprep.subr.mxu0 0.0
        %1308 = vmatpush1.xpose.msra.mxu0 0.0
        %1309 = vmatprep.subr.mxu0 0.0
        %1310 = vmatpush1.xpose.msra.mxu0 0.0
        %1311 = vmatprep.subr.mxu0 0.0
        %1312 = vmatpush1.xpose.msra.mxu0 0.0
        %1313 = vmatprep.subr.mxu0 0.0
        %1314 = vmatpush1.xpose.msra.mxu0 0.0
        %1315 = vmatprep.subr.mxu0 0.0
        %1316 = vmatpush1.xpose.msra.mxu0 0.0
        %1317 = vmatprep.subr.mxu0 0.0
        %1318 = vmatpush1.xpose.msra.mxu0 0.0
        %1319 = vmatprep.subr.mxu0 0.0
        %1320 = vmatpush1.xpose.msra.mxu0 0.0
        %1321 = vmatprep.subr.mxu0 0.0
        %1322 = vmatpush1.xpose.msra.mxu0 0.0
        %1323 = vmatprep.subr.mxu0 0.0
        %1324 = vmatpush1.xpose.msra.mxu0 0.0
        %1325 = vmatprep.subr.mxu0 0.0
        %1326 = vmatpush1.xpose.msra.mxu0 0.0
        %1327 = vmatprep.subr.mxu0 0.0
        %1328 = vmatpush1.xpose.msra.mxu0 0.0
        %1329 = vmatprep.subr.mxu0 0.0
        %1330 = vmatpush1.xpose.msra.mxu0 0.0
        %1331 = vmatprep.subr.mxu0 0.0
        %1332 = vmatpush1.xpose.msra.mxu0 0.0
        %1333 = vmatprep.subr.mxu0 0.0
        %1334 = vmatpush1.xpose.msra.mxu0 0.0
        %1335 = vmatprep.subr.mxu0 0.0
        %1336 = vmatpush1.xpose.msra.mxu0 0.0
        %1337 = vmatprep.subr.mxu0 0.0
        %1338 = vmatpush1.xpose.msra.mxu0 0.0
        %1339 = vmatprep.subr.mxu0 0.0
        %1340 = vmatpush1.xpose.msra.mxu0 0.0
        %1341 = vmatprep.subr.mxu0 0.0
        %1342 = vmatpush1.xpose.msra.mxu0 0.0
        %1343 = vmatprep.subr.mxu0 0.0
        %1344 = vmatpush1.xpose.msra.mxu0 0.0
        %1345 = vmatprep.subr.mxu0 0.0
        %1346 = vmatpush1.xpose.msra.mxu0 0.0
        %1347 = vmatprep.subr.mxu0 0.0
        %1348 = vmatpush1.xpose.msra.mxu0 0.0
        %1349 = vmatprep.subr.mxu0 0.0
        %1350 = vmatpush1.xpose.msra.mxu0 0.0
        %1351 = vmatprep.subr.mxu0 0.0
        %1352 = vmatpush1.xpose.msra.mxu0 0.0
        %1353 = vmatprep.subr.mxu0 0.0
        %1354 = vmatpush1.xpose.msra.mxu0 0.0
        %1355 = vmatprep.subr.mxu0 0.0
        %1356 = vmatpush1.xpose.msra.mxu0 0.0
        %1357 = vmatprep.subr.mxu0 0.0
        %1358 = vmatpush1.xpose.msra.mxu0 0.0
        %1359 = vmatprep.subr.mxu0 0.0
        %1360 = vmatpush1.xpose.msra.mxu0 0.0
        %1361 = vmatprep.subr.mxu0 0.0
        %1362 = vmatpush1.xpose.msra.mxu0 0.0
        %1363 = vmatprep.mubr.f32.mxu0 0.0
        %1364 = vmatmul.mubr.f32.gmra.mrb[0].mxu0 %v1285
        %v1365 = vpop.f32.mrb[0].mxu0
        %v1366 = vadd.f32 %v1282, %v1365
        %v1367 = vpop.f32.mrb[0].mxu0
        %1368 = vdwg.mxu0
        %1369 = vst.msk [vmem:[%s295] sm:$0xff] %vm320, %v1366
        %s1370 = sand.u32 %s191, 1
        %s1371 = scalar_lea.sflag [#allocation3], %s1370
        %s1372 = sand.u32 %s191, 1
        %s1373 = smul.addr %s1372, 8
        %s1374 = scalar_lea.vmem [#allocation2], %s1373
        // Predicated region
        $region49: #{tpu_custom_call.1} parent=47 // pred_check
          %p1375 = pneg %p201
        $region50: #{tpu_custom_call.1} parent=47 // pred_check_branch
          %1377 = sbr.rel (%p1375) target = $region52
        $region51: #{tpu_custom_call.1} parent=47 // pred_region
          %s1379 = ssub.s32 128, 128
          %1380 = vsyncadd %s1371, %s1379
          %s1381 = smul.addr %s21, 128
          %s1382 = scalar_lea.hbm %s7, %s1381
          %s1384 = sshll.u32 %s1374, 4
          %s1385 = int_to_ptr.vmem [resolvable:$true] %s1384
          %1387 = dma.vmem_to_hbm [thread:$0]  %s1385, 128, %s1382, %s1371
        $region52: #{tpu_custom_call.1} parent=47 // pred_fallthru
          _
      $region48: #{tpu_custom_call.1} parent=5 // pred_fallthru
        _
      %p1388 = scmp.le.s32.totalorder 2, %s16
      // Predicated region
      $region53: #{tpu_custom_call.1} parent=5 // pred_check
        %p1389 = pneg %p1388
      $region54: #{tpu_custom_call.1} parent=5 // pred_check_branch
        %1391 = sbr.rel (%p1389) target = $region56
      $region55: #{tpu_custom_call.1} parent=5 // pred_region
        %s1392 = ssub.s32 %s16, 2
        // Predicated region
        $region57: #{tpu_custom_call.1} parent=55 // pred_check
          %p1393 = pneg %p207
        $region58: #{tpu_custom_call.1} parent=55 // pred_check_branch
          %1395 = sbr.rel (%p1393) target = $region60
        $region59: #{tpu_custom_call.1} parent=55 // pred_region
          %s1396 = sand.u32 %s192, 1
          %s1397 = scalar_lea.sflag [#allocation3], %s1396
          %s1398 = sand.u32 %s192, 1
          %s1399 = smul.addr %s1398, 8
          %s1400 = scalar_lea.vmem [#allocation2], %s1399
          %1401 = dma.done %s1397, 128
        $region60: #{tpu_custom_call.1} parent=55 // pred_fallthru
          _
      $region56: #{tpu_custom_call.1} parent=5 // pred_fallthru
        _
    $region6: #{tpu_custom_call.1} parent=1 // loop_footer
      %s20 = sadd.s32 1, %s16
    $region7: #{tpu_custom_call.1} parent=1 // loop_footer_branch
      %15 = sbr.rel target = $region3
    $region8: #{tpu_custom_call.1} parent=1 // loop_exit
      _
    %1402 = vsyncpa [#allocation3], 1
    %s1403 = scalar_lea.sflag [#allocation3], 1
    %1404 = vsyncpa %s1403, 1

</llo_original>
